<compile_context>
chip_gen: v7x
topology: tpu7x:2x2x1
jax: 0.10.0
libtpu: 0.0.40
codegen_flags: <defaults>
</compile_context>

<pallas_src>
import jax
import jax.numpy as jnp
from jax import lax
from jax.experimental import pallas as pl
from jax.experimental.pallas import tpu as pltpu

# ---- module hyper-parameters (Config) -------------------------------------------------
B, C, H, W = 2, 8, 16, 16          # channels must be >= reduction ratio
RED = 8                            # ATTENTION_REDUCTION_RATIO
C_RED = C // RED                   # 1
K_DW, P_DW = 5, 2                  # LATERAL_INHIBITION_KERNEL_SIZE, padding
K_SP, P_SP = 7, 3                  # spatial attention conv
PAD = max(P_DW, P_SP)              # 3
INHIB_STRENGTH = 0.3
BN_EPS = 1e-5

HP = H + 2 * PAD                   # 22 padded rows
WB = W * B                         # 32 folded (w, b) lanes, un-padded
WPB = (W + 2 * PAD) * B            # 44 folded (w, b) lanes, padded

# static layout assumptions (per review: fail loudly if Config changes)
assert B == 2, "channel-attention lane masks assume exactly two batches on lanes"
assert C % RED == 0 and C_RED >= 1
assert PAD >= P_DW and PAD >= P_SP

# ---- SMEM scalar-vector layout ---------------------------------------------------------
DOG_OFF = 0
IDX_ALPHA = DOG_OFF + K_DW * K_DW      # 25
IDX_GAMMA = IDX_ALPHA + 1
IDX_GMIX = IDX_GAMMA + 1
IDX_SPB = IDX_GMIX + 1
IDX_BNSC = IDX_SPB + 1
IDX_BNSH = IDX_BNSC + 1
B1_OFF = IDX_BNSH + 1
N_SCAL = B1_OFF + C_RED                # 32


# ---- Pallas kernel ---------------------------------------------------------------------
def _bio_kernel(x_ref, cap_ref, spw_ref, ps_ref, o_ref, xp_scr, pool_scr):
    # x_ref   : (H, C, WB)        un-padded input; rows leading, channels on sublanes,
    #                             (W, B) interleaved on lanes (lane = w*B + b).
    # cap_ref : (2*C_RED+1, C, 1) channel-attention params: rows [w1_r], [w2[:, r]], [b2].
    # spw_ref : (K_SP*K_SP, 2, 1) 7x7 spatial-conv taps; sublane 0 = avg map, 1 = max map.
    # ps_ref  : (N_SCAL,) SMEM    DoG taps, scalars, b1.
    # xp_scr  : (HP, C, WPB)      zero-padded input scratch (VMEM).
    # pool_scr: (HP, 2, WPB)      stacked channel-mean / channel-max maps (VMEM).
    alpha = ps_ref[IDX_ALPHA]        # LateralInhibition.alpha
    gamma = ps_ref[IDX_GAMMA]        # BiologicalAttention.gamma
    g_mix = ps_ref[IDX_GMIX]         # sigmoid(BioInspiredBlock.mixing) (precomputed glue)
    sp_b = ps_ref[IDX_SPB]           # spatial conv bias
    bn_scale = ps_ref[IDX_BNSC]      # BatchNorm2d(1) eval-mode scale
    bn_shift = ps_ref[IDX_BNSH]      # BatchNorm2d(1) eval-mode shift

    # ---- phase A: build zero-padded input in VMEM (pad fused into the kernel) ----------
    xp_scr[...] = jnp.zeros_like(xp_scr)
    xp_scr[PAD:PAD + H, :, PAD * B: PAD * B + WB] = x_ref[...].astype(jnp.float32)

    # ---- phase B: lateral inhibition (depthwise 5x5 DoG, same kernel per channel) ------
    # padded offset = PAD - P_DW = 1; static lane offset per j, dynamic row offset per i.
    def dog_row(i, dw):
        for j in range(K_DW):
            wgt = ps_ref[DOG_OFF + i * K_DW + j]
            col = B * (j + (PAD - P_DW))
            win = xp_scr[pl.ds(i + (PAD - P_DW), H), :, col:col + WB]   # (H, C, WB)
            dw = dw + wgt * win
        return dw

    dw = lax.fori_loop(0, K_DW, dog_row, jnp.zeros((H, C, WB), jnp.float32))
    x_int = xp_scr[PAD:PAD + H, :, PAD * B: PAD * B + WB]               # (H, C, WB)
    # out = x + (1-g)*alpha*dw   (the g*gamma*(x*ca)*sa term is added in phase F)
    o_ref[...] = x_int + ((1.0 - g_mix) * alpha) * dw

    # ---- phase C: channel mean / max maps (padded border stays zero, as in the ref) ----
    xpad = xp_scr[...]                                                  # (HP, C, WPB)
    pool_scr[...] = jnp.concatenate(
        [jnp.mean(xpad, axis=1, keepdims=True),
         jnp.max(xpad, axis=1, keepdims=True)], axis=1)                 # (HP, 2, WPB)

    # ---- phase D: channel attention: GAP -> 1x1 -> ReLU -> 1x1 -> sigmoid --------------
    # lane-replicated per batch; per-batch sums isolated with a lane-parity mask.
    x_int = xp_scr[PAD:PAD + H, :, PAD * B: PAD * B + WB]
    colsum = jnp.sum(x_int, axis=0)                                     # (C, WB)
    lane = lax.broadcasted_iota(jnp.int32, (1, WB), 1)
    m0 = (lane % B == 0).astype(jnp.float32)                            # batch-0 lanes
    m1 = 1.0 - m0
    inv_hw = 1.0 / float(H * W)
    logits = cap_ref[2 * C_RED]                                         # b2, (C, 1)
    for r in range(C_RED):
        t = cap_ref[r] * colsum                                         # w1_r[c]*colsum
        s0 = jnp.sum(jnp.sum(t * m0, axis=1, keepdims=True), axis=0, keepdims=True)
        s1 = jnp.sum(jnp.sum(t * m1, axis=1, keepdims=True), axis=0, keepdims=True)
        hid = jnp.maximum((s0 * m0 + s1 * m1) * inv_hw + ps_ref[B1_OFF + r], 0.0)
        logits = logits + cap_ref[C_RED + r] * hid                      # + w2[:, r]*hidden
    ca = jax.nn.sigmoid(logits)                                         # (C, WB)

    # ---- phase E: spatial attention: 7x7 conv over stacked (avg, max) maps -------------
    def sp_row(i, acc2):
        for j in range(K_SP):
            w = spw_ref[pl.ds(i * K_SP + j, 1)]                         # (1, 2, 1)
            win = pool_scr[pl.ds(i, H), :, B * j: B * j + WB]           # (H, 2, WB)
            acc2 = acc2 + w * win
        return acc2

    acc2 = lax.fori_loop(0, K_SP, sp_row, jnp.zeros((H, 2, WB), jnp.float32))
    sa = jax.nn.sigmoid(
        (jnp.sum(acc2, axis=1, keepdims=True) + sp_b) * bn_scale + bn_shift)  # (H, 1, WB)

    # ---- phase F: add the attention contribution ----------------------------------------
    x_int = xp_scr[PAD:PAD + H, :, PAD * B: PAD * B + WB]
    o_ref[...] = o_ref[...] + ((g_mix * gamma) * (x_int * ca)) * sa


# ---- wrapper ---------------------------------------------------------------------------
def bio_inspired_block(x_nchw, p):
    b, c, h, w = x_nchw.shape
    assert (b, c, h, w) == (B, C, H, W)
    xf = x_nchw.astype(jnp.float32)
    # (B, C, H, W) -> (H, C, W, B) -> fold (W, B) onto lanes; padding is done in-kernel.
    x_folded = jnp.transpose(xf, (2, 1, 3, 0)).reshape(H, C, WB)

    out = pl.pallas_call(
        _bio_kernel,
        out_shape=jax.ShapeDtypeStruct((H, C, WB), jnp.float32),
        grid=(1,),
        in_specs=[
            pl.BlockSpec((H, C, WB), lambda i: (0, 0, 0)),
            pl.BlockSpec((2 * C_RED + 1, C, 1), lambda i: (0, 0, 0)),
            pl.BlockSpec((K_SP * K_SP, 2, 1), lambda i: (0, 0, 0)),
            pl.BlockSpec(memory_space=pltpu.MemorySpace.SMEM),           # packed scalars
        ],
        out_specs=pl.BlockSpec((H, C, WB), lambda i: (0, 0, 0)),
        scratch_shapes=[
            pltpu.VMEM((HP, C, WPB), jnp.float32),                       # padded input
            pltpu.VMEM((HP, 2, WPB), jnp.float32),                       # pooled maps
        ],
        compiler_params=pltpu.CompilerParams(dimension_semantics=("arbitrary",)),
    )(x_folded, p["cap"], p["spw2"], p["scal_vec"])
    # (H, C, W*B) -> (H, C, W, B) -> (B, C, H, W)
    return jnp.transpose(out.reshape(H, C, W, B), (3, 1, 0, 2))


# ---- deterministic parameter construction (mirrors the PyTorch __init__) ----------------
def make_params(key):
    kw1, kb1, kw2, kb2, ksw, ksb = jax.random.split(key, 6)
    w1 = jax.random.normal(kw1, (C_RED, C), jnp.float32) * 0.2   # Conv2d(C, C//r, 1).weight
    b1 = jax.random.normal(kb1, (C_RED,), jnp.float32) * 0.1
    w2 = jax.random.normal(kw2, (C, C_RED), jnp.float32) * 0.2   # Conv2d(C//r, C, 1).weight
    b2 = jax.random.normal(kb2, (C,), jnp.float32) * 0.1
    spw = jax.random.normal(ksw, (1, 2, K_SP, K_SP), jnp.float32) * 0.1  # Conv2d(2,1,7).weight
    spb = jax.random.normal(ksb, (), jnp.float32) * 0.1

    # DoG kernel, as in LateralInhibition.init_dog_kernel (identical per channel).
    g = jnp.linspace(-(K_DW // 2), K_DW // 2, K_DW)
    gy, gx = jnp.meshgrid(g, g, indexing="ij")
    dist = gy ** 2 + gx ** 2
    cs, ss = K_DW / 6.0, K_DW / 3.0
    dog = jnp.exp(-dist / (2 * cs ** 2)) - INHIB_STRENGTH * jnp.exp(-dist / (2 * ss ** 2))
    dog = dog / jnp.sum(jnp.abs(dog))

    alpha = jnp.float32(1.0)
    gamma = jnp.float32(1.0)
    mixing = jnp.float32(0.5)
    g_mix = jax.nn.sigmoid(mixing)
    bn_scale = jnp.float32(1.0) / jnp.sqrt(jnp.float32(1.0) + BN_EPS)
    bn_shift = jnp.float32(0.0)

    # ---- packed kernel operands ----
    cap = jnp.concatenate([w1, w2.T, b2.reshape(1, C)], axis=0).reshape(2 * C_RED + 1, C, 1)
    # 7x7 taps, row-major over (i, j); sublane 0 = avg-map weight, 1 = max-map weight.
    spw2 = jnp.stack([spw[0, 0].reshape(-1), spw[0, 1].reshape(-1)], axis=1)
    spw2 = spw2.reshape(K_SP * K_SP, 2, 1).astype(jnp.float32)
    scal_vec = jnp.concatenate([
        dog.reshape(-1),                       # 25 DoG taps
        jnp.stack([alpha, gamma, g_mix, spb, bn_scale, bn_shift]),
        b1.reshape(-1),
    ]).astype(jnp.float32)
    assert scal_vec.shape[0] == N_SCAL

    return dict(
        cap=cap, spw2=spw2, scal_vec=scal_vec,
        # raw params for the pure-JAX reference
        w1=w1, b1=b1, w2=w2, b2=b2, spw=spw, spb=spb, dog=dog,
        alpha=alpha, gamma=gamma, mixing=mixing, bn_scale=bn_scale, bn_shift=bn_shift,
    )


# ---- pure-JAX reference (mirrors the PyTorch forward, BN in eval mode) -------------------
def reference(x_nchw, p):
    xf = x_nchw.astype(jnp.float32)
    b, c, h, w = xf.shape
    dog_w = jnp.broadcast_to(p["dog"], (c, 1, K_DW, K_DW))
    inhib_conv = lax.conv_general_dilated(
        xf, dog_w, (1, 1), [(P_DW, P_DW), (P_DW, P_DW)],
        dimension_numbers=("NCHW", "OIHW", "NCHW"), feature_group_count=c)
    inhib_out = xf + p["alpha"] * inhib_conv

    pooled = jnp.mean(xf, axis=(2, 3))                              # (B, C)
    hid = jnp.maximum(pooled @ p["w1"].T + p["b1"], 0.0)
    ca = jax.nn.sigmoid(hid @ p["w2"].T + p["b2"])                  # (B, C)
    feat = xf * ca[:, :, None, None]
    ap = jnp.mean(xf, axis=1, keepdims=True)
    mp = jnp.max(xf, axis=1, keepdims=True)
    spf = jnp.concatenate([ap, mp], axis=1)                         # (B, 2, H, W)
    spc = lax.conv_general_dilated(
        spf, p["spw"], (1, 1), [(P_SP, P_SP), (P_SP, P_SP)],
        dimension_numbers=("NCHW", "OIHW", "NCHW")) + p["spb"]
    sa = jax.nn.sigmoid(spc * p["bn_scale"] + p["bn_shift"])
    attn_out = xf + p["gamma"] * (feat * sa)

    g = jax.nn.sigmoid(p["mixing"])
    return g * attn_out + (1.0 - g) * inhib_out


if __name__ == "__main__":
    x = jax.random.normal(jax.random.PRNGKey(0), (B, C, H, W), jnp.float32)   # NCHW
    params = make_params(jax.random.PRNGKey(42))

    out = jax.block_until_ready(bio_inspired_block(x, params))
    ref = jax.block_until_ready(reference(x, params))

    assert out.shape == x.shape and out.dtype == jnp.float32
    err = float(jnp.max(jnp.abs(out - ref)))
    if err > 5e-4:
        raise AssertionError(f"Pallas kernel mismatch vs reference: max abs err = {err}")
    print("KERNEL_OK")
</pallas_src>

<mosaic_0001>
module attributes {stable_mosaic.version = 11 : i64} {
  func.func @_bio_kernel(%arg0: i32, %arg1: memref<16x8x32xf32, #tpu.memory_space<vmem>>, %arg2: memref<3x8x1xf32, #tpu.memory_space<vmem>>, %arg3: memref<49x2x1xf32, #tpu.memory_space<vmem>>, %arg4: memref<32xf32, #tpu.memory_space<smem>>, %arg5: memref<16x8x32xf32, #tpu.memory_space<vmem>>, %arg6: memref<22x8x44xf32, #tpu.memory_space<vmem>>, %arg7: memref<22x2x44xf32, #tpu.memory_space<vmem>>) attributes {dimension_semantics = [#tpu.dimension_semantics<arbitrary>], iteration_bounds = array<i64: 1>, scalar_prefetch = 0 : i64, scratch_operands = 2 : i64, tpu.core_type = #tpu.core_type<tc>, window_params = [{pipeline_mode = #tpu.pipeline_mode<synchronous>, transform_indices = @transform_0, window_bounds = array<i64: 16, 8, 32>}, {pipeline_mode = #tpu.pipeline_mode<synchronous>, transform_indices = @transform_1, window_bounds = array<i64: 3, 8, 1>}, {pipeline_mode = #tpu.pipeline_mode<synchronous>, transform_indices = @transform_2, window_bounds = array<i64: 49, 2, 1>}, {transform_indices = @transform_3, window_bounds = array<i64: 32>}, {pipeline_mode = #tpu.pipeline_mode<synchronous>, transform_indices = @transform_4, window_bounds = array<i64: 16, 8, 32>}]} {
    %c25 = arith.constant 25 : index
    %0 = memref.load %arg4[%c25] : memref<32xf32, #tpu.memory_space<smem>>
    %c26 = arith.constant 26 : index
    %1 = memref.load %arg4[%c26] : memref<32xf32, #tpu.memory_space<smem>>
    %c27 = arith.constant 27 : index
    %2 = memref.load %arg4[%c27] : memref<32xf32, #tpu.memory_space<smem>>
    %c28 = arith.constant 28 : index
    %3 = memref.load %arg4[%c28] : memref<32xf32, #tpu.memory_space<smem>>
    %c29 = arith.constant 29 : index
    %4 = memref.load %arg4[%c29] : memref<32xf32, #tpu.memory_space<smem>>
    %c30 = arith.constant 30 : index
    %5 = memref.load %arg4[%c30] : memref<32xf32, #tpu.memory_space<smem>>
    %cst = arith.constant 0.000000e+00 : f32
    %6 = vector.broadcast %cst : f32 to vector<22x8x44xf32>
    %c0 = arith.constant 0 : index
    %c0_0 = arith.constant 0 : index
    %c0_1 = arith.constant 0 : index
    %7 = vector.load %arg6[%c0, %c0_0, %c0_1] : memref<22x8x44xf32, #tpu.memory_space<vmem>>, vector<22x8x44xf32>
    tpu.vector_store %arg6[%c0, %c0_0, %c0_1], %6 {strides = array<i32>} : memref<22x8x44xf32, #tpu.memory_space<vmem>>, vector<22x8x44xf32>,
    %c0_2 = arith.constant 0 : index
    %c0_3 = arith.constant 0 : index
    %c0_4 = arith.constant 0 : index
    %8 = vector.load %arg1[%c0_2, %c0_3, %c0_4] : memref<16x8x32xf32, #tpu.memory_space<vmem>>, vector<16x8x32xf32>
    %c3 = arith.constant 3 : index
    %c0_5 = arith.constant 0 : index
    %c6 = arith.constant 6 : index
    %9 = vector.load %arg6[%c3, %c0_5, %c6] : memref<22x8x44xf32, #tpu.memory_space<vmem>>, vector<16x8x32xf32>
    tpu.vector_store %arg6[%c3, %c0_5, %c6], %8 {strides = array<i32>} : memref<22x8x44xf32, #tpu.memory_space<vmem>>, vector<16x8x32xf32>,
    %cst_6 = arith.constant 0.000000e+00 : f32
    %10 = vector.broadcast %cst_6 : f32 to vector<16x8x32xf32>
    %c0_i32 = arith.constant 0 : i32
    %c5_i32 = arith.constant 5 : i32
    %11 = arith.addi %c0_i32, %c5_i32 : i32
    %c1_i32 = arith.constant 1 : i32
    %12 = scf.for %arg8 = %c0_i32 to %11 step %c1_i32 iter_args(%arg9 = %10) -> (vector<16x8x32xf32>)  : i32 {
      %c5_i32_64 = arith.constant 5 : i32
      %124 = arith.muli %arg8, %c5_i32_64 : i32
      %c0_i32_65 = arith.constant 0 : i32
      %125 = arith.addi %c0_i32_65, %124 : i32
      %c0_i32_66 = arith.constant 0 : i32
      %126 = arith.addi %125, %c0_i32_66 : i32
      %127 = arith.index_cast %126 : i32 to index
      %128 = memref.load %arg4[%127] : memref<32xf32, #tpu.memory_space<smem>>
      %c1_i32_67 = arith.constant 1 : i32
      %129 = arith.addi %arg8, %c1_i32_67 : i32
      %130 = arith.index_cast %129 : i32 to index
      %c0_68 = arith.constant 0 : index
      %c2_69 = arith.constant 2 : index
      %131 = vector.load %arg6[%130, %c0_68, %c2_69] : memref<22x8x44xf32, #tpu.memory_space<vmem>>, vector<16x8x32xf32>
      %132 = vector.broadcast %128 : f32 to vector<16x8x32xf32>
      %133 = arith.mulf %132, %131 : vector<16x8x32xf32>
      %134 = arith.addf %arg9, %133 : vector<16x8x32xf32>
      %c5_i32_70 = arith.constant 5 : i32
      %135 = arith.muli %arg8, %c5_i32_70 : i32
      %c0_i32_71 = arith.constant 0 : i32
      %136 = arith.addi %c0_i32_71, %135 : i32
      %c1_i32_72 = arith.constant 1 : i32
      %137 = arith.addi %136, %c1_i32_72 : i32
      %138 = arith.index_cast %137 : i32 to index
      %139 = memref.load %arg4[%138] : memref<32xf32, #tpu.memory_space<smem>>
      %c1_i32_73 = arith.constant 1 : i32
      %140 = arith.addi %arg8, %c1_i32_73 : i32
      %141 = arith.index_cast %140 : i32 to index
      %c0_74 = arith.constant 0 : index
      %c4 = arith.constant 4 : index
      %142 = vector.load %arg6[%141, %c0_74, %c4] : memref<22x8x44xf32, #tpu.memory_space<vmem>>, vector<16x8x32xf32>
      %143 = vector.broadcast %139 : f32 to vector<16x8x32xf32>
      %144 = arith.mulf %143, %142 : vector<16x8x32xf32>
      %145 = arith.addf %134, %144 : vector<16x8x32xf32>
      %c5_i32_75 = arith.constant 5 : i32
      %146 = arith.muli %arg8, %c5_i32_75 : i32
      %c0_i32_76 = arith.constant 0 : i32
      %147 = arith.addi %c0_i32_76, %146 : i32
      %c2_i32_77 = arith.constant 2 : i32
      %148 = arith.addi %147, %c2_i32_77 : i32
      %149 = arith.index_cast %148 : i32 to index
      %150 = memref.load %arg4[%149] : memref<32xf32, #tpu.memory_space<smem>>
      %c1_i32_78 = arith.constant 1 : i32
      %151 = arith.addi %arg8, %c1_i32_78 : i32
      %152 = arith.index_cast %151 : i32 to index
      %c0_79 = arith.constant 0 : index
      %c6_80 = arith.constant 6 : index
      %153 = vector.load %arg6[%152, %c0_79, %c6_80] : memref<22x8x44xf32, #tpu.memory_space<vmem>>, vector<16x8x32xf32>
      %154 = vector.broadcast %150 : f32 to vector<16x8x32xf32>
      %155 = arith.mulf %154, %153 : vector<16x8x32xf32>
      %156 = arith.addf %145, %155 : vector<16x8x32xf32>
      %c5_i32_81 = arith.constant 5 : i32
      %157 = arith.muli %arg8, %c5_i32_81 : i32
      %c0_i32_82 = arith.constant 0 : i32
      %158 = arith.addi %c0_i32_82, %157 : i32
      %c3_i32 = arith.constant 3 : i32
      %159 = arith.addi %158, %c3_i32 : i32
      %160 = arith.index_cast %159 : i32 to index
      %161 = memref.load %arg4[%160] : memref<32xf32, #tpu.memory_space<smem>>
      %c1_i32_83 = arith.constant 1 : i32
      %162 = arith.addi %arg8, %c1_i32_83 : i32
      %163 = arith.index_cast %162 : i32 to index
      %c0_84 = arith.constant 0 : index
      %c8 = arith.constant 8 : index
      %164 = vector.load %arg6[%163, %c0_84, %c8] : memref<22x8x44xf32, #tpu.memory_space<vmem>>, vector<16x8x32xf32>
      %165 = vector.broadcast %161 : f32 to vector<16x8x32xf32>
      %166 = arith.mulf %165, %164 : vector<16x8x32xf32>
      %167 = arith.addf %156, %166 : vector<16x8x32xf32>
      %c5_i32_85 = arith.constant 5 : i32
      %168 = arith.muli %arg8, %c5_i32_85 : i32
      %c0_i32_86 = arith.constant 0 : i32
      %169 = arith.addi %c0_i32_86, %168 : i32
      %c4_i32 = arith.constant 4 : i32
      %170 = arith.addi %169, %c4_i32 : i32
      %171 = arith.index_cast %170 : i32 to index
      %172 = memref.load %arg4[%171] : memref<32xf32, #tpu.memory_space<smem>>
      %c1_i32_87 = arith.constant 1 : i32
      %173 = arith.addi %arg8, %c1_i32_87 : i32
      %174 = arith.index_cast %173 : i32 to index
      %c0_88 = arith.constant 0 : index
      %c10 = arith.constant 10 : index
      %175 = vector.load %arg6[%174, %c0_88, %c10] : memref<22x8x44xf32, #tpu.memory_space<vmem>>, vector<16x8x32xf32>
      %176 = vector.broadcast %172 : f32 to vector<16x8x32xf32>
      %177 = arith.mulf %176, %175 : vector<16x8x32xf32>
      %178 = arith.addf %167, %177 : vector<16x8x32xf32>
      scf.yield %178 : vector<16x8x32xf32>
    }
    %c5_i32_7 = arith.constant 5 : i32
    %c3_8 = arith.constant 3 : index
    %c0_9 = arith.constant 0 : index
    %c6_10 = arith.constant 6 : index
    %13 = vector.load %arg6[%c3_8, %c0_9, %c6_10] : memref<22x8x44xf32, #tpu.memory_space<vmem>>, vector<16x8x32xf32>
    %cst_11 = arith.constant 1.000000e+00 : f32
    %14 = arith.subf %cst_11, %2 : f32
    %15 = arith.mulf %14, %0 : f32
    %16 = vector.broadcast %15 : f32 to vector<16x8x32xf32>
    %17 = arith.mulf %16, %12 : vector<16x8x32xf32>
    %18 = arith.addf %13, %17 : vector<16x8x32xf32>
    %c0_12 = arith.constant 0 : index
    %c0_13 = arith.constant 0 : index
    %c0_14 = arith.constant 0 : index
    %19 = vector.load %arg5[%c0_12, %c0_13, %c0_14] : memref<16x8x32xf32, #tpu.memory_space<vmem>>, vector<16x8x32xf32>
    tpu.vector_store %arg5[%c0_12, %c0_13, %c0_14], %18 {strides = array<i32>} : memref<16x8x32xf32, #tpu.memory_space<vmem>>, vector<16x8x32xf32>,
    %c0_15 = arith.constant 0 : index
    %c0_16 = arith.constant 0 : index
    %c0_17 = arith.constant 0 : index
    %20 = vector.load %arg6[%c0_15, %c0_16, %c0_17] : memref<22x8x44xf32, #tpu.memory_space<vmem>>, vector<22x8x44xf32>
    %cst_18 = arith.constant dense<0.000000e+00> : vector<22x44xf32>
    %21 = vector.multi_reduction <add>, %20, %cst_18 [1] : vector<22x8x44xf32> to vector<22x44xf32>
    %22 = vector.shape_cast %21 : vector<22x44xf32> to vector<22x1x44xf32>
    %cst_19 = arith.constant 8.000000e+00 : f32
    %23 = vector.broadcast %cst_19 : f32 to vector<22x1x44xf32>
    %24 = arith.divf %22, %23 : vector<22x1x44xf32>
    %cst_20 = arith.constant dense<0xFF800000> : vector<22x44xf32>
    %25 = vector.multi_reduction <maximumf>, %20, %cst_20 [1] : vector<22x8x44xf32> to vector<22x44xf32>
    %26 = vector.shape_cast %25 : vector<22x44xf32> to vector<22x1x44xf32>
    %27 = tpu.concatenate %24, %26 in 1 : vector<22x1x44xf32>, vector<22x1x44xf32> -> vector<22x2x44xf32>
    %c0_21 = arith.constant 0 : index
    %c0_22 = arith.constant 0 : index
    %c0_23 = arith.constant 0 : index
    %28 = vector.load %arg7[%c0_21, %c0_22, %c0_23] : memref<22x2x44xf32, #tpu.memory_space<vmem>>, vector<22x2x44xf32>
    tpu.vector_store %arg7[%c0_21, %c0_22, %c0_23], %27 {strides = array<i32>} : memref<22x2x44xf32, #tpu.memory_space<vmem>>, vector<22x2x44xf32>,
    %c3_24 = arith.constant 3 : index
    %c0_25 = arith.constant 0 : index
    %c6_26 = arith.constant 6 : index
    %29 = vector.load %arg6[%c3_24, %c0_25, %c6_26] : memref<22x8x44xf32, #tpu.memory_space<vmem>>, vector<16x8x32xf32>
    %cst_27 = arith.constant dense<0.000000e+00> : vector<8x32xf32>
    %30 = vector.multi_reduction <add>, %29, %cst_27 [0] : vector<16x8x32xf32> to vector<8x32xf32>
    %31 = tpu.iota {dimensions = array<i32: 1>} : vector<1x32xi32>
    %c2_i32 = arith.constant 2 : i32
    %c0_i32_28 = arith.constant 0 : i32
    %32 = arith.cmpi eq, %c2_i32, %c0_i32_28 : i32
    %c1_i32_29 = arith.constant 1 : i32
    %33 = arith.select %32, %c1_i32_29, %c2_i32 : i32
    %34 = vector.broadcast %33 : i32 to vector<1x32xi32>
    %35 = arith.remsi %31, %34 : vector<1x32xi32>
    %c0_i32_30 = arith.constant 0 : i32
    %36 = vector.broadcast %c0_i32_30 : i32 to vector<1x32xi32>
    %37 = arith.cmpi ne, %35, %36 : vector<1x32xi32>
    %c0_i32_31 = arith.constant 0 : i32
    %38 = vector.broadcast %c0_i32_31 : i32 to vector<1x32xi32>
    %39 = arith.cmpi slt, %35, %38 : vector<1x32xi32>
    %c0_i32_32 = arith.constant 0 : i32
    %40 = arith.cmpi slt, %33, %c0_i32_32 : i32
    %41 = vector.broadcast %40 : i1 to vector<1x32xi1>
    %42 = vector.broadcast %41 : vector<1x32xi1> to vector<1x32xi1>
    %43 = arith.xori %39, %42 : vector<1x32xi1>
    %44 = arith.andi %43, %37 : vector<1x32xi1>
    %45 = vector.broadcast %33 : i32 to vector<1x32xi32>
    %46 = arith.addi %35, %45 : vector<1x32xi32>
    %47 = arith.select %44, %46, %35 : vector<1x32xi1>, vector<1x32xi32>
    %c0_i32_33 = arith.constant 0 : i32
    %48 = vector.broadcast %c0_i32_33 : i32 to vector<1x32xi32>
    %49 = arith.cmpi eq, %47, %48 : vector<1x32xi32>
    %50 = arith.extui %49 : vector<1x32xi1> to vector<1x32xi32>
    %51 = arith.sitofp %50 : vector<1x32xi32> to vector<1x32xf32>
    %cst_34 = arith.constant 1.000000e+00 : f32
    %52 = vector.broadcast %cst_34 : f32 to vector<1x32xf32>
    %53 = arith.subf %52, %51 : vector<1x32xf32>
    %c2 = arith.constant 2 : index
    %c0_35 = arith.constant 0 : index
    %c0_36 = arith.constant 0 : index
    %54 = vector.load %arg2[%c2, %c0_35, %c0_36] : memref<3x8x1xf32, #tpu.memory_space<vmem>>, vector<1x8x1xf32>
    %55 = vector.shape_cast %54 : vector<1x8x1xf32> to vector<8x1xf32>
    %c0_37 = arith.constant 0 : index
    %c0_38 = arith.constant 0 : index
    %c0_39 = arith.constant 0 : index
    %56 = vector.load %arg2[%c0_37, %c0_38, %c0_39] : memref<3x8x1xf32, #tpu.memory_space<vmem>>, vector<1x8x1xf32>
    %57 = vector.shape_cast %56 : vector<1x8x1xf32> to vector<8x1xf32>
    %58 = vector.broadcast %57 : vector<8x1xf32> to vector<8x32xf32>
    %59 = arith.mulf %58, %30 : vector<8x32xf32>
    %60 = vector.broadcast %51 : vector<1x32xf32> to vector<8x32xf32>
    %61 = arith.mulf %59, %60 : vector<8x32xf32>
    %cst_40 = arith.constant dense<0.000000e+00> : vector<8xf32>
    %62 = vector.multi_reduction <add>, %61, %cst_40 [1] : vector<8x32xf32> to vector<8xf32>
    %63 = vector.shape_cast %62 : vector<8xf32> to vector<8x1xf32>
    %cst_41 = arith.constant dense<0.000000e+00> : vector<1xf32>
    %64 = vector.multi_reduction <add>, %63, %cst_41 [0] : vector<8x1xf32> to vector<1xf32>
    %65 = vector.shape_cast %64 : vector<1xf32> to vector<1x1xf32>
    %66 = vector.broadcast %53 : vector<1x32xf32> to vector<8x32xf32>
    %67 = arith.mulf %59, %66 : vector<8x32xf32>
    %cst_42 = arith.constant dense<0.000000e+00> : vector<8xf32>
    %68 = vector.multi_reduction <add>, %67, %cst_42 [1] : vector<8x32xf32> to vector<8xf32>
    %69 = vector.shape_cast %68 : vector<8xf32> to vector<8x1xf32>
    %cst_43 = arith.constant dense<0.000000e+00> : vector<1xf32>
    %70 = vector.multi_reduction <add>, %69, %cst_43 [0] : vector<8x1xf32> to vector<1xf32>
    %71 = vector.shape_cast %70 : vector<1xf32> to vector<1x1xf32>
    %72 = vector.broadcast %65 : vector<1x1xf32> to vector<1x32xf32>
    %73 = arith.mulf %72, %51 : vector<1x32xf32>
    %74 = vector.broadcast %71 : vector<1x1xf32> to vector<1x32xf32>
    %75 = arith.mulf %74, %53 : vector<1x32xf32>
    %76 = arith.addf %73, %75 : vector<1x32xf32>
    %cst_44 = arith.constant 3.906250e-03 : f32
    %77 = vector.broadcast %cst_44 : f32 to vector<1x32xf32>
    %78 = arith.mulf %76, %77 : vector<1x32xf32>
    %c31 = arith.constant 31 : index
    %79 = memref.load %arg4[%c31] : memref<32xf32, #tpu.memory_space<smem>>
    %80 = vector.broadcast %79 : f32 to vector<1x32xf32>
    %81 = arith.addf %78, %80 : vector<1x32xf32>
    %cst_45 = arith.constant 0.000000e+00 : f32
    %82 = vector.broadcast %cst_45 : f32 to vector<1x32xf32>
    %83 = arith.maximumf %81, %82 : vector<1x32xf32>
    %c1 = arith.constant 1 : index
    %c0_46 = arith.constant 0 : index
    %c0_47 = arith.constant 0 : index
    %84 = vector.load %arg2[%c1, %c0_46, %c0_47] : memref<3x8x1xf32, #tpu.memory_space<vmem>>, vector<1x8x1xf32>
    %85 = vector.shape_cast %84 : vector<1x8x1xf32> to vector<8x1xf32>
    %86 = vector.broadcast %85 : vector<8x1xf32> to vector<8x32xf32>
    %87 = vector.broadcast %83 : vector<1x32xf32> to vector<8x32xf32>
    %88 = arith.mulf %86, %87 : vector<8x32xf32>
    %89 = vector.broadcast %55 : vector<8x1xf32> to vector<8x32xf32>
    %90 = arith.addf %89, %88 : vector<8x32xf32>
    %91 = arith.negf %90 : vector<8x32xf32>
    %92 = math.exp %91 : vector<8x32xf32>
    %cst_48 = arith.constant 1.000000e+00 : f32
    %93 = vector.broadcast %cst_48 : f32 to vector<8x32xf32>
    %94 = arith.addf %93, %92 : vector<8x32xf32>
    %95 = arith.divf %93, %94 : vector<8x32xf32>
    %cst_49 = arith.constant 0.000000e+00 : f32
    %96 = vector.broadcast %cst_49 : f32 to vector<16x2x32xf32>
    %c0_i32_50 = arith.constant 0 : i32
    %c7_i32 = arith.constant 7 : i32
    %97 = arith.addi %c0_i32_50, %c7_i32 : i32
    %c1_i32_51 = arith.constant 1 : i32
    %98 = scf.for %arg8 = %c0_i32_50 to %97 step %c1_i32_51 iter_args(%arg9 = %96) -> (vector<16x2x32xf32>)  : i32 {
      %c7_i32_64 = arith.constant 7 : i32
      %124 = arith.muli %arg8, %c7_i32_64 : i32
      %c0_i32_65 = arith.constant 0 : i32
      %125 = arith.addi %124, %c0_i32_65 : i32
      %126 = arith.index_cast %125 : i32 to index
      %c0_66 = arith.constant 0 : index
      %c0_67 = arith.constant 0 : index
      %127 = vector.load %arg3[%126, %c0_66, %c0_67] : memref<49x2x1xf32, #tpu.memory_space<vmem>>, vector<1x2x1xf32>
      %128 = arith.index_cast %arg8 : i32 to index
      %c0_68 = arith.constant 0 : index
      %c0_69 = arith.constant 0 : index
      %129 = vector.load %arg7[%128, %c0_68, %c0_69] : memref<22x2x44xf32, #tpu.memory_space<vmem>>, vector<16x2x32xf32>
      %130 = vector.broadcast %127 : vector<1x2x1xf32> to vector<16x2x32xf32>
      %131 = arith.mulf %130, %129 : vector<16x2x32xf32>
      %132 = arith.addf %arg9, %131 : vector<16x2x32xf32>
      %c7_i32_70 = arith.constant 7 : i32
      %133 = arith.muli %arg8, %c7_i32_70 : i32
      %c1_i32_71 = arith.constant 1 : i32
      %134 = arith.addi %133, %c1_i32_71 : i32
      %135 = arith.index_cast %134 : i32 to index
      %c0_72 = arith.constant 0 : index
      %c0_73 = arith.constant 0 : index
      %136 = vector.load %arg3[%135, %c0_72, %c0_73] : memref<49x2x1xf32, #tpu.memory_space<vmem>>, vector<1x2x1xf32>
      %137 = arith.index_cast %arg8 : i32 to index
      %c0_74 = arith.constant 0 : index
      %c2_75 = arith.constant 2 : index
      %138 = vector.load %arg7[%137, %c0_74, %c2_75] : memref<22x2x44xf32, #tpu.memory_space<vmem>>, vector<16x2x32xf32>
      %139 = vector.broadcast %136 : vector<1x2x1xf32> to vector<16x2x32xf32>
      %140 = arith.mulf %139, %138 : vector<16x2x32xf32>
      %141 = arith.addf %132, %140 : vector<16x2x32xf32>
      %c7_i32_76 = arith.constant 7 : i32
      %142 = arith.muli %arg8, %c7_i32_76 : i32
      %c2_i32_77 = arith.constant 2 : i32
      %143 = arith.addi %142, %c2_i32_77 : i32
      %144 = arith.index_cast %143 : i32 to index
      %c0_78 = arith.constant 0 : index
      %c0_79 = arith.constant 0 : index
      %145 = vector.load %arg3[%144, %c0_78, %c0_79] : memref<49x2x1xf32, #tpu.memory_space<vmem>>, vector<1x2x1xf32>
      %146 = arith.index_cast %arg8 : i32 to index
      %c0_80 = arith.constant 0 : index
      %c4 = arith.constant 4 : index
      %147 = vector.load %arg7[%146, %c0_80, %c4] : memref<22x2x44xf32, #tpu.memory_space<vmem>>, vector<16x2x32xf32>
      %148 = vector.broadcast %145 : vector<1x2x1xf32> to vector<16x2x32xf32>
      %149 = arith.mulf %148, %147 : vector<16x2x32xf32>
      %150 = arith.addf %141, %149 : vector<16x2x32xf32>
      %c7_i32_81 = arith.constant 7 : i32
      %151 = arith.muli %arg8, %c7_i32_81 : i32
      %c3_i32 = arith.constant 3 : i32
      %152 = arith.addi %151, %c3_i32 : i32
      %153 = arith.index_cast %152 : i32 to index
      %c0_82 = arith.constant 0 : index
      %c0_83 = arith.constant 0 : index
      %154 = vector.load %arg3[%153, %c0_82, %c0_83] : memref<49x2x1xf32, #tpu.memory_space<vmem>>, vector<1x2x1xf32>
      %155 = arith.index_cast %arg8 : i32 to index
      %c0_84 = arith.constant 0 : index
      %c6_85 = arith.constant 6 : index
      %156 = vector.load %arg7[%155, %c0_84, %c6_85] : memref<22x2x44xf32, #tpu.memory_space<vmem>>, vector<16x2x32xf32>
      %157 = vector.broadcast %154 : vector<1x2x1xf32> to vector<16x2x32xf32>
      %158 = arith.mulf %157, %156 : vector<16x2x32xf32>
      %159 = arith.addf %150, %158 : vector<16x2x32xf32>
      %c7_i32_86 = arith.constant 7 : i32
      %160 = arith.muli %arg8, %c7_i32_86 : i32
      %c4_i32 = arith.constant 4 : i32
      %161 = arith.addi %160, %c4_i32 : i32
      %162 = arith.index_cast %161 : i32 to index
      %c0_87 = arith.constant 0 : index
      %c0_88 = arith.constant 0 : index
      %163 = vector.load %arg3[%162, %c0_87, %c0_88] : memref<49x2x1xf32, #tpu.memory_space<vmem>>, vector<1x2x1xf32>
      %164 = arith.index_cast %arg8 : i32 to index
      %c0_89 = arith.constant 0 : index
      %c8 = arith.constant 8 : index
      %165 = vector.load %arg7[%164, %c0_89, %c8] : memref<22x2x44xf32, #tpu.memory_space<vmem>>, vector<16x2x32xf32>
      %166 = vector.broadcast %163 : vector<1x2x1xf32> to vector<16x2x32xf32>
      %167 = arith.mulf %166, %165 : vector<16x2x32xf32>
      %168 = arith.addf %159, %167 : vector<16x2x32xf32>
      %c7_i32_90 = arith.constant 7 : i32
      %169 = arith.muli %arg8, %c7_i32_90 : i32
      %c5_i32_91 = arith.constant 5 : i32
      %170 = arith.addi %169, %c5_i32_91 : i32
      %171 = arith.index_cast %170 : i32 to index
      %c0_92 = arith.constant 0 : index
      %c0_93 = arith.constant 0 : index
      %172 = vector.load %arg3[%171, %c0_92, %c0_93] : memref<49x2x1xf32, #tpu.memory_space<vmem>>, vector<1x2x1xf32>
      %173 = arith.index_cast %arg8 : i32 to index
      %c0_94 = arith.constant 0 : index
      %c10 = arith.constant 10 : index
      %174 = vector.load %arg7[%173, %c0_94, %c10] : memref<22x2x44xf32, #tpu.memory_space<vmem>>, vector<16x2x32xf32>
      %175 = vector.broadcast %172 : vector<1x2x1xf32> to vector<16x2x32xf32>
      %176 = arith.mulf %175, %174 : vector<16x2x32xf32>
      %177 = arith.addf %168, %176 : vector<16x2x32xf32>
      %c7_i32_95 = arith.constant 7 : i32
      %178 = arith.muli %arg8, %c7_i32_95 : i32
      %c6_i32 = arith.constant 6 : i32
      %179 = arith.addi %178, %c6_i32 : i32
      %180 = arith.index_cast %179 : i32 to index
      %c0_96 = arith.constant 0 : index
      %c0_97 = arith.constant 0 : index
      %181 = vector.load %arg3[%180, %c0_96, %c0_97] : memref<49x2x1xf32, #tpu.memory_space<vmem>>, vector<1x2x1xf32>
      %182 = arith.index_cast %arg8 : i32 to index
      %c0_98 = arith.constant 0 : index
      %c12 = arith.constant 12 : index
      %183 = vector.load %arg7[%182, %c0_98, %c12] : memref<22x2x44xf32, #tpu.memory_space<vmem>>, vector<16x2x32xf32>
      %184 = vector.broadcast %181 : vector<1x2x1xf32> to vector<16x2x32xf32>
      %185 = arith.mulf %184, %183 : vector<16x2x32xf32>
      %186 = arith.addf %177, %185 : vector<16x2x32xf32>
      scf.yield %186 : vector<16x2x32xf32>
    }
    %c7_i32_52 = arith.constant 7 : i32
    %cst_53 = arith.constant dense<0.000000e+00> : vector<16x32xf32>
    %99 = vector.multi_reduction <add>, %98, %cst_53 [1] : vector<16x2x32xf32> to vector<16x32xf32>
    %100 = vector.shape_cast %99 : vector<16x32xf32> to vector<16x1x32xf32>
    %101 = vector.broadcast %3 : f32 to vector<16x1x32xf32>
    %102 = arith.addf %100, %101 : vector<16x1x32xf32>
    %103 = vector.broadcast %4 : f32 to vector<16x1x32xf32>
    %104 = arith.mulf %102, %103 : vector<16x1x32xf32>
    %105 = vector.broadcast %5 : f32 to vector<16x1x32xf32>
    %106 = arith.addf %104, %105 : vector<16x1x32xf32>
    %107 = arith.negf %106 : vector<16x1x32xf32>
    %108 = math.exp %107 : vector<16x1x32xf32>
    %cst_54 = arith.constant 1.000000e+00 : f32
    %109 = vector.broadcast %cst_54 : f32 to vector<16x1x32xf32>
    %110 = arith.addf %109, %108 : vector<16x1x32xf32>
    %111 = arith.divf %109, %110 : vector<16x1x32xf32>
    %c3_55 = arith.constant 3 : index
    %c0_56 = arith.constant 0 : index
    %c6_57 = arith.constant 6 : index
    %112 = vector.load %arg6[%c3_55, %c0_56, %c6_57] : memref<22x8x44xf32, #tpu.memory_space<vmem>>, vector<16x8x32xf32>
    %c0_58 = arith.constant 0 : index
    %c0_59 = arith.constant 0 : index
    %c0_60 = arith.constant 0 : index
    %113 = vector.load %arg5[%c0_58, %c0_59, %c0_60] : memref<16x8x32xf32, #tpu.memory_space<vmem>>, vector<16x8x32xf32>
    %114 = arith.mulf %2, %1 : f32
    %115 = vector.shape_cast %95 : vector<8x32xf32> to vector<1x8x32xf32>
    %116 = vector.broadcast %115 : vector<1x8x32xf32> to vector<16x8x32xf32>
    %117 = arith.mulf %112, %116 : vector<16x8x32xf32>
    %118 = vector.broadcast %114 : f32 to vector<16x8x32xf32>
    %119 = arith.mulf %118, %117 : vector<16x8x32xf32>
    %120 = vector.broadcast %111 : vector<16x1x32xf32> to vector<16x8x32xf32>
    %121 = arith.mulf %119, %120 : vector<16x8x32xf32>
    %122 = arith.addf %113, %121 : vector<16x8x32xf32>
    %c0_61 = arith.constant 0 : index
    %c0_62 = arith.constant 0 : index
    %c0_63 = arith.constant 0 : index
    %123 = vector.load %arg5[%c0_61, %c0_62, %c0_63] : memref<16x8x32xf32, #tpu.memory_space<vmem>>, vector<16x8x32xf32>
    tpu.vector_store %arg5[%c0_61, %c0_62, %c0_63], %122 {strides = array<i32>} : memref<16x8x32xf32, #tpu.memory_space<vmem>>, vector<16x8x32xf32>,
    return
  }
  func.func @transform_0(%arg0: i32) -> (i32, i32, i32) {
    %c0_i32 = arith.constant 0 : i32
    %c0_i32_0 = arith.constant 0 : i32
    %c0_i32_1 = arith.constant 0 : i32
    %c0_i32_2 = arith.constant 0 : i32
    return %c0_i32, %c0_i32_0, %c0_i32_1 : i32, i32, i32
  }
  func.func @transform_1(%arg0: i32) -> (i32, i32, i32) {
    %c0_i32 = arith.constant 0 : i32
    %c0_i32_0 = arith.constant 0 : i32
    %c0_i32_1 = arith.constant 0 : i32
    %c0_i32_2 = arith.constant 0 : i32
    return %c0_i32, %c0_i32_0, %c0_i32_1 : i32, i32, i32
  }
  func.func @transform_2(%arg0: i32) -> (i32, i32, i32) {
    %c0_i32 = arith.constant 0 : i32
    %c0_i32_0 = arith.constant 0 : i32
    %c0_i32_1 = arith.constant 0 : i32
    %c0_i32_2 = arith.constant 0 : i32
    return %c0_i32, %c0_i32_0, %c0_i32_1 : i32, i32, i32
  }
  func.func @transform_3(%arg0: i32) -> i32 {
    %c0_i32 = arith.constant 0 : i32
    %c0_i32_0 = arith.constant 0 : i32
    return %c0_i32 : i32
  }
  func.func @transform_4(%arg0: i32) -> (i32, i32, i32) {
    %c0_i32 = arith.constant 0 : i32
    %c0_i32_0 = arith.constant 0 : i32
    %c0_i32_1 = arith.constant 0 : i32
    %c0_i32_2 = arith.constant 0 : i32
    return %c0_i32, %c0_i32_0, %c0_i32_1 : i32, i32, i32
  }
}

</mosaic_0001>

<llo_original>
// kernel: tpu_custom_call.1
$region0: #{tpu_custom_call.1}
  #allocation0 [shape = 'u32[]', space=smem, size = 0x4, offset = 0x4, fixed_abs, tag = 'smem constant byte address 0x4 - core index']
  #allocation1 [shape = 'u32[144,128]{1,0:T(1,128)}', space=vmem, size = 0x12000, scoped, tag = 'internal scratch']
  #allocation2 [shape = 'f32[22,8,44]{2,1,0:T(8,128)}', space=vmem, size = 0x16000, scoped, tag = 'scratch operand']
  #allocation3 [shape = 'f32[22,2,44]{2,1,0:T(2,128)}', space=vmem, size = 0x5800, scoped, tag = 'scratch operand']
  %s0 = inlined_call_operand.hbm [shape: f32[16,8,32], index: 0, kind: input, shape index: {}]
  %s1 = inlined_call_operand.vmem [shape: f32[3,8,1], index: 1, kind: input, shape index: {}]
  %s2 = inlined_call_operand.vmem [shape: f32[49,2,1], index: 2, kind: input, shape index: {}]
  %s3 = inlined_call_operand.vmem [shape: f32[32], index: 3, kind: input, shape index: {}]
  %s4 = inlined_call_operand.hbm [shape: f32[16,8,32], index: 4, kind: output, shape index: {}]
  %s5 = sld [smem:[#allocation0]]
  $region48: #{tpu_custom_call.1} parent=0
    _
  %s7 = ssub.s32 1, %s5
  %s8 = scalar_select 0, %s7, %s5
  $region1: #{tpu_custom_call.1} parent=0
    #allocation4 [shape = 'u8[65536]{0}', space=vmem, size = 0x10000, scoped, tag = 'input window, operand 0, single buffered']
    #allocation5 [shape = 's32[1]{0}', space=sflag, size = 0x4, scoped, tag = 'scoped memory for tpu_custom_call.1']
    #allocation6 [shape = 's32[1]{0}', space=sflag, size = 0x4, scoped, tag = 'scoped memory for tpu_custom_call.1']
    #allocation7 [shape = 's32[1]{0}', space=sflag, size = 0x4, scoped, tag = 'scoped memory for tpu_custom_call.1']
    #allocation8 [shape = 'u8[512]{0}', space=smem, size = 0x200, scoped, tag = 'input window, operand 3, single buffered']
    #allocation9 [shape = 'u8[65536]{0}', space=vmem, size = 0x10000, scoped, tag = 'output window, operand 0, single buffered']
    %9 = vsyncpa [#allocation5], 0
    %10 = vsyncpa [#allocation7], 0
    %11 = vsyncpa [#allocation6], 0
    // Predicated region
    $region2: #{tpu_custom_call.1} parent=1 // pred_check
      _
    $region3: #{tpu_custom_call.1} parent=1 // pred_check_branch
      %13 = sbr.rel (0) target = $region5
    $region4: #{tpu_custom_call.1} parent=1 // pred_region
      %s15 = ssub.s32 2048, 2048
      %16 = vsyncadd [#allocation5], %s15
      %s17 = sshll.u32 [#allocation4], 4
      %s18 = int_to_ptr.vmem [resolvable:$true] %s17
      %23 = dma.hbm_to_vmem [thread:$0]  %s0, 2048, %s18, [#allocation5], 128, 128, 8
    $region5: #{tpu_custom_call.1} parent=1 // pred_fallthru
      _
    // Predicated region
    $region6: #{tpu_custom_call.1} parent=1 // pred_check
      _
    $region7: #{tpu_custom_call.1} parent=1 // pred_check_branch
      %25 = sbr.rel (0) target = $region9
    $region8: #{tpu_custom_call.1} parent=1 // pred_region
      _
    $region9: #{tpu_custom_call.1} parent=1 // pred_fallthru
      _
    // Predicated region
    $region10: #{tpu_custom_call.1} parent=1 // pred_check
      _
    $region11: #{tpu_custom_call.1} parent=1 // pred_check_branch
      %27 = sbr.rel (0) target = $region13
    $region12: #{tpu_custom_call.1} parent=1 // pred_region
      _
    $region13: #{tpu_custom_call.1} parent=1 // pred_fallthru
      _
    // Predicated region
    $region14: #{tpu_custom_call.1} parent=1 // pred_check
      _
    $region15: #{tpu_custom_call.1} parent=1 // pred_check_branch
      %29 = sbr.rel (0) target = $region17
    $region16: #{tpu_custom_call.1} parent=1 // pred_region
      %s31 = ssub.s32 16, 16
      %32 = vsyncadd [#allocation7], %s31
      %s34 = sshll.u32 %s3, 4
      %s35 = int_to_ptr.vmem [resolvable:$true] %s34
      %37 = dma.vmem_to_smem %s35, 16, [#allocation8], [#allocation7]
    $region17: #{tpu_custom_call.1} parent=1 // pred_fallthru
      _
    // Predicated region
    $region18: #{tpu_custom_call.1} parent=1 // pred_check
      _
    $region19: #{tpu_custom_call.1} parent=1 // pred_check_branch
      %39 = sbr.rel (0) target = $region21
    $region20: #{tpu_custom_call.1} parent=1 // pred_region
      %40 = dma.done [#allocation5], 2048
    $region21: #{tpu_custom_call.1} parent=1 // pred_fallthru
      _
    // Predicated region
    $region22: #{tpu_custom_call.1} parent=1 // pred_check
      _
    $region23: #{tpu_custom_call.1} parent=1 // pred_check_branch
      %42 = sbr.rel (0) target = $region25
    $region24: #{tpu_custom_call.1} parent=1 // pred_region
      %43 = dma.done [#allocation7], 16
    $region25: #{tpu_custom_call.1} parent=1 // pred_fallthru
      _
    %44 = sfence
    %s45 = sld [smem:[#allocation8 + $0x19]]
    %s46 = sld [smem:[#allocation8 + $0x1a]]
    %s47 = sld [smem:[#allocation8 + $0x1b]]
    %s48 = sld [smem:[#allocation8 + $0x1c]]
    %s49 = sld [smem:[#allocation8 + $0x1d]]
    %s50 = sld [smem:[#allocation8 + $0x1e]]
    %vm51 = vcmask 359424
    %52 = vst.msk [vmem:[#allocation2] sm:$0xff] %vm51, 0.0
    %53 = vst.msk [vmem:[#allocation2 + $0x8] sm:$0xff] %vm51, 0.0
    %54 = vst.msk [vmem:[#allocation2 + $0x10] sm:$0xff] %vm51, 0.0
    %55 = vst.msk [vmem:[#allocation2 + $0x18] sm:$0xff] %vm51, 0.0
    %56 = vst.msk [vmem:[#allocation2 + $0x20] sm:$0xff] %vm51, 0.0
    %57 = vst.msk [vmem:[#allocation2 + $0x28] sm:$0xff] %vm51, 0.0
    %58 = vst.msk [vmem:[#allocation2 + $0x30] sm:$0xff] %vm51, 0.0
    %59 = vst.msk [vmem:[#allocation2 + $0x38] sm:$0xff] %vm51, 0.0
    %60 = vst.msk [vmem:[#allocation2 + $0x40] sm:$0xff] %vm51, 0.0
    %61 = vst.msk [vmem:[#allocation2 + $0x48] sm:$0xff] %vm51, 0.0
    %62 = vst.msk [vmem:[#allocation2 + $0x50] sm:$0xff] %vm51, 0.0
    %63 = vst.msk [vmem:[#allocation2 + $0x58] sm:$0xff] %vm51, 0.0
    %64 = vst.msk [vmem:[#allocation2 + $0x60] sm:$0xff] %vm51, 0.0
    %65 = vst.msk [vmem:[#allocation2 + $0x68] sm:$0xff] %vm51, 0.0
    %66 = vst.msk [vmem:[#allocation2 + $0x70] sm:$0xff] %vm51, 0.0
    %67 = vst.msk [vmem:[#allocation2 + $0x78] sm:$0xff] %vm51, 0.0
    %68 = vst.msk [vmem:[#allocation2 + $0x80] sm:$0xff] %vm51, 0.0
    %69 = vst.msk [vmem:[#allocation2 + $0x88] sm:$0xff] %vm51, 0.0
    %70 = vst.msk [vmem:[#allocation2 + $0x90] sm:$0xff] %vm51, 0.0
    %71 = vst.msk [vmem:[#allocation2 + $0x98] sm:$0xff] %vm51, 0.0
    %72 = vst.msk [vmem:[#allocation2 + $0xa0] sm:$0xff] %vm51, 0.0
    %73 = vst.msk [vmem:[#allocation2 + $0xa8] sm:$0xff] %vm51, 0.0
    %v74 = vld [vmem:[#allocation4] sm:$0xff]
    %v75 = vld [vmem:[#allocation4 + $0x8] sm:$0xff]
    %v76 = vld [vmem:[#allocation4 + $0x10] sm:$0xff]
    %v77 = vld [vmem:[#allocation4 + $0x18] sm:$0xff]
    %v78 = vld [vmem:[#allocation4 + $0x20] sm:$0xff]
    %v79 = vld [vmem:[#allocation4 + $0x28] sm:$0xff]
    %v80 = vld [vmem:[#allocation4 + $0x30] sm:$0xff]
    %v81 = vld [vmem:[#allocation4 + $0x38] sm:$0xff]
    %v82 = vld [vmem:[#allocation4 + $0x40] sm:$0xff]
    %v83 = vld [vmem:[#allocation4 + $0x48] sm:$0xff]
    %v84 = vld [vmem:[#allocation4 + $0x50] sm:$0xff]
    %v85 = vld [vmem:[#allocation4 + $0x58] sm:$0xff]
    %v86 = vld [vmem:[#allocation4 + $0x60] sm:$0xff]
    %v87 = vld [vmem:[#allocation4 + $0x68] sm:$0xff]
    %v88 = vld [vmem:[#allocation4 + $0x70] sm:$0xff]
    %v89 = vld [vmem:[#allocation4 + $0x78] sm:$0xff]
    %106 = vrot.lane.b32.xlu0 %v74, 6
    %v107 = vpop.permute.xlu0 %106
    %108 = vrot.lane.b32.xlu0 %v75, 6
    %v109 = vpop.permute.xlu0 %108
    %110 = vrot.lane.b32.xlu0 %v76, 6
    %v111 = vpop.permute.xlu0 %110
    %112 = vrot.lane.b32.xlu0 %v77, 6
    %v113 = vpop.permute.xlu0 %112
    %114 = vrot.lane.b32.xlu0 %v78, 6
    %v115 = vpop.permute.xlu0 %114
    %116 = vrot.lane.b32.xlu0 %v79, 6
    %v117 = vpop.permute.xlu0 %116
    %118 = vrot.lane.b32.xlu0 %v80, 6
    %v119 = vpop.permute.xlu0 %118
    %120 = vrot.lane.b32.xlu0 %v81, 6
    %v121 = vpop.permute.xlu0 %120
    %122 = vrot.lane.b32.xlu0 %v82, 6
    %v123 = vpop.permute.xlu0 %122
    %124 = vrot.lane.b32.xlu0 %v83, 6
    %v125 = vpop.permute.xlu0 %124
    %126 = vrot.lane.b32.xlu0 %v84, 6
    %v127 = vpop.permute.xlu0 %126
    %128 = vrot.lane.b32.xlu0 %v85, 6
    %v129 = vpop.permute.xlu0 %128
    %130 = vrot.lane.b32.xlu0 %v86, 6
    %v131 = vpop.permute.xlu0 %130
    %132 = vrot.lane.b32.xlu0 %v87, 6
    %v133 = vpop.permute.xlu0 %132
    %134 = vrot.lane.b32.xlu0 %v88, 6
    %v135 = vpop.permute.xlu0 %134
    %136 = vrot.lane.b32.xlu0 %v89, 6
    %v137 = vpop.permute.xlu0 %136
    %s154 = scalar_lea.vmem [#allocation2], 24
    %vm155 = vcmask 310320
    %156 = vst.msk [vmem:[%s154] sm:$0xff] %vm155, %v107
    %157 = vst.msk [vmem:[%s154 + $0x8] sm:$0xff] %vm155, %v109
    %158 = vst.msk [vmem:[%s154 + $0x10] sm:$0xff] %vm155, %v111
    %159 = vst.msk [vmem:[%s154 + $0x18] sm:$0xff] %vm155, %v113
    %160 = vst.msk [vmem:[%s154 + $0x20] sm:$0xff] %vm155, %v115
    %161 = vst.msk [vmem:[%s154 + $0x28] sm:$0xff] %vm155, %v117
    %162 = vst.msk [vmem:[%s154 + $0x30] sm:$0xff] %vm155, %v119
    %163 = vst.msk [vmem:[%s154 + $0x38] sm:$0xff] %vm155, %v121
    %164 = vst.msk [vmem:[%s154 + $0x40] sm:$0xff] %vm155, %v123
    %165 = vst.msk [vmem:[%s154 + $0x48] sm:$0xff] %vm155, %v125
    %166 = vst.msk [vmem:[%s154 + $0x50] sm:$0xff] %vm155, %v127
    %167 = vst.msk [vmem:[%s154 + $0x58] sm:$0xff] %vm155, %v129
    %168 = vst.msk [vmem:[%s154 + $0x60] sm:$0xff] %vm155, %v131
    %169 = vst.msk [vmem:[%s154 + $0x68] sm:$0xff] %vm155, %v133
    %170 = vst.msk [vmem:[%s154 + $0x70] sm:$0xff] %vm155, %v135
    %171 = vst.msk [vmem:[%s154 + $0x78] sm:$0xff] %vm155, %v137
    loop: start=0, step=1, limit=5
    $region26: #{tpu_custom_call.1} parent=1 // loop_pre_header
      _
    $region27: #{tpu_custom_call.1} parent=1 // loop_header
      %s173 = sphi 0, %s177
      %p174 = scmp.ge.s32.totalorder %s173, 5
      %v178 = vphi 0.0, %v628
      %v179 = vphi 0.0, %v629
      %v180 = vphi 0.0, %v630
      %v181 = vphi 0.0, %v631
      %v182 = vphi 0.0, %v632
      %v183 = vphi 0.0, %v633
      %v184 = vphi 0.0, %v634
      %v185 = vphi 0.0, %v635
      %v186 = vphi 0.0, %v636
      %v187 = vphi 0.0, %v637
      %v188 = vphi 0.0, %v638
      %v189 = vphi 0.0, %v639
      %v190 = vphi 0.0, %v640
      %v191 = vphi 0.0, %v641
      %v192 = vphi 0.0, %v642
      %v193 = vphi 0.0, %v643
    $region28: #{tpu_custom_call.1} parent=1 // loop_header_branch
      %176 = sbr.rel (%p174) target = $region32
    $region29: #{tpu_custom_call.1} parent=1 // loop_body
      %s194 = smul.u32 %s173, 5
      %s195 = sld [smem:[#allocation8 + %s194]]
      %s196 = sadd.s32 %s173, 1
      %s197 = smul.u32 %s196, 8
      %s198 = scalar_lea.vmem [#allocation2], %s197
      %v199 = vld [vmem:[%s198] sm:$0xff]
      %v200 = vld [vmem:[%s198 + $0x8] sm:$0xff]
      %v201 = vld [vmem:[%s198 + $0x10] sm:$0xff]
      %v202 = vld [vmem:[%s198 + $0x18] sm:$0xff]
      %v203 = vld [vmem:[%s198 + $0x20] sm:$0xff]
      %v204 = vld [vmem:[%s198 + $0x28] sm:$0xff]
      %v205 = vld [vmem:[%s198 + $0x30] sm:$0xff]
      %v206 = vld [vmem:[%s198 + $0x38] sm:$0xff]
      %v207 = vld [vmem:[%s198 + $0x40] sm:$0xff]
      %v208 = vld [vmem:[%s198 + $0x48] sm:$0xff]
      %v209 = vld [vmem:[%s198 + $0x50] sm:$0xff]
      %v210 = vld [vmem:[%s198 + $0x58] sm:$0xff]
      %v211 = vld [vmem:[%s198 + $0x60] sm:$0xff]
      %v212 = vld [vmem:[%s198 + $0x68] sm:$0xff]
      %v213 = vld [vmem:[%s198 + $0x70] sm:$0xff]
      %v214 = vld [vmem:[%s198 + $0x78] sm:$0xff]
      %v215 = vstv %s195
      %v216 = vmul.f32 %v215, %v199
      %v217 = vmul.f32 %v215, %v200
      %v218 = vmul.f32 %v215, %v201
      %v219 = vmul.f32 %v215, %v202
      %v220 = vmul.f32 %v215, %v203
      %v221 = vmul.f32 %v215, %v204
      %v222 = vmul.f32 %v215, %v205
      %v223 = vmul.f32 %v215, %v206
      %v224 = vmul.f32 %v215, %v207
      %v225 = vmul.f32 %v215, %v208
      %v226 = vmul.f32 %v215, %v209
      %v227 = vmul.f32 %v215, %v210
      %v228 = vmul.f32 %v215, %v211
      %v229 = vmul.f32 %v215, %v212
      %v230 = vmul.f32 %v215, %v213
      %v231 = vmul.f32 %v215, %v214
      %v232 = vadd.f32 %v178, %v216
      %v233 = vadd.f32 %v179, %v217
      %v234 = vadd.f32 %v180, %v218
      %v235 = vadd.f32 %v181, %v219
      %v236 = vadd.f32 %v182, %v220
      %v237 = vadd.f32 %v183, %v221
      %v238 = vadd.f32 %v184, %v222
      %v239 = vadd.f32 %v185, %v223
      %v240 = vadd.f32 %v186, %v224
      %v241 = vadd.f32 %v187, %v225
      %v242 = vadd.f32 %v188, %v226
      %v243 = vadd.f32 %v189, %v227
      %v244 = vadd.f32 %v190, %v228
      %v245 = vadd.f32 %v191, %v229
      %v246 = vadd.f32 %v192, %v230
      %v247 = vadd.f32 %v193, %v231
      %s248 = sadd.s32 %s194, 1
      %s249 = sld [smem:[#allocation8 + %s248]]
      %v250 = vstv %s249
      %v251 = vmul.f32 %v250, %v199
      %v252 = vmul.f32 %v250, %v200
      %v253 = vmul.f32 %v250, %v201
      %v254 = vmul.f32 %v250, %v202
      %v255 = vmul.f32 %v250, %v203
      %v256 = vmul.f32 %v250, %v204
      %v257 = vmul.f32 %v250, %v205
      %v258 = vmul.f32 %v250, %v206
      %v259 = vmul.f32 %v250, %v207
      %v260 = vmul.f32 %v250, %v208
      %v261 = vmul.f32 %v250, %v209
      %v262 = vmul.f32 %v250, %v210
      %v263 = vmul.f32 %v250, %v211
      %v264 = vmul.f32 %v250, %v212
      %v265 = vmul.f32 %v250, %v213
      %v266 = vmul.f32 %v250, %v214
      %283 = vrot.lane.b32.xlu0 %v251, 126
      %v284 = vpop.permute.xlu0 %283
      %285 = vrot.lane.b32.xlu0 %v252, 126
      %v286 = vpop.permute.xlu0 %285
      %287 = vrot.lane.b32.xlu0 %v253, 126
      %v288 = vpop.permute.xlu0 %287
      %289 = vrot.lane.b32.xlu0 %v254, 126
      %v290 = vpop.permute.xlu0 %289
      %291 = vrot.lane.b32.xlu0 %v255, 126
      %v292 = vpop.permute.xlu0 %291
      %293 = vrot.lane.b32.xlu0 %v256, 126
      %v294 = vpop.permute.xlu0 %293
      %295 = vrot.lane.b32.xlu0 %v257, 126
      %v296 = vpop.permute.xlu0 %295
      %297 = vrot.lane.b32.xlu0 %v258, 126
      %v298 = vpop.permute.xlu0 %297
      %299 = vrot.lane.b32.xlu0 %v259, 126
      %v300 = vpop.permute.xlu0 %299
      %301 = vrot.lane.b32.xlu0 %v260, 126
      %v302 = vpop.permute.xlu0 %301
      %303 = vrot.lane.b32.xlu0 %v261, 126
      %v304 = vpop.permute.xlu0 %303
      %305 = vrot.lane.b32.xlu0 %v262, 126
      %v306 = vpop.permute.xlu0 %305
      %307 = vrot.lane.b32.xlu0 %v263, 126
      %v308 = vpop.permute.xlu0 %307
      %309 = vrot.lane.b32.xlu0 %v264, 126
      %v310 = vpop.permute.xlu0 %309
      %311 = vrot.lane.b32.xlu0 %v265, 126
      %v312 = vpop.permute.xlu0 %311
      %313 = vrot.lane.b32.xlu0 %v266, 126
      %v314 = vpop.permute.xlu0 %313
      %v331 = vadd.f32 %v232, %v284
      %v332 = vadd.f32 %v233, %v286
      %v333 = vadd.f32 %v234, %v288
      %v334 = vadd.f32 %v235, %v290
      %v335 = vadd.f32 %v236, %v292
      %v336 = vadd.f32 %v237, %v294
      %v337 = vadd.f32 %v238, %v296
      %v338 = vadd.f32 %v239, %v298
      %v339 = vadd.f32 %v240, %v300
      %v340 = vadd.f32 %v241, %v302
      %v341 = vadd.f32 %v242, %v304
      %v342 = vadd.f32 %v243, %v306
      %v343 = vadd.f32 %v244, %v308
      %v344 = vadd.f32 %v245, %v310
      %v345 = vadd.f32 %v246, %v312
      %v346 = vadd.f32 %v247, %v314
      %s347 = sadd.s32 %s194, 2
      %s348 = sld [smem:[#allocation8 + %s347]]
      %v349 = vstv %s348
      %v350 = vmul.f32 %v349, %v199
      %v351 = vmul.f32 %v349, %v200
      %v352 = vmul.f32 %v349, %v201
      %v353 = vmul.f32 %v349, %v202
      %v354 = vmul.f32 %v349, %v203
      %v355 = vmul.f32 %v349, %v204
      %v356 = vmul.f32 %v349, %v205
      %v357 = vmul.f32 %v349, %v206
      %v358 = vmul.f32 %v349, %v207
      %v359 = vmul.f32 %v349, %v208
      %v360 = vmul.f32 %v349, %v209
      %v361 = vmul.f32 %v349, %v210
      %v362 = vmul.f32 %v349, %v211
      %v363 = vmul.f32 %v349, %v212
      %v364 = vmul.f32 %v349, %v213
      %v365 = vmul.f32 %v349, %v214
      %382 = vrot.lane.b32.xlu0 %v350, 124
      %v383 = vpop.permute.xlu0 %382
      %384 = vrot.lane.b32.xlu0 %v351, 124
      %v385 = vpop.permute.xlu0 %384
      %386 = vrot.lane.b32.xlu0 %v352, 124
      %v387 = vpop.permute.xlu0 %386
      %388 = vrot.lane.b32.xlu0 %v353, 124
      %v389 = vpop.permute.xlu0 %388
      %390 = vrot.lane.b32.xlu0 %v354, 124
      %v391 = vpop.permute.xlu0 %390
      %392 = vrot.lane.b32.xlu0 %v355, 124
      %v393 = vpop.permute.xlu0 %392
      %394 = vrot.lane.b32.xlu0 %v356, 124
      %v395 = vpop.permute.xlu0 %394
      %396 = vrot.lane.b32.xlu0 %v357, 124
      %v397 = vpop.permute.xlu0 %396
      %398 = vrot.lane.b32.xlu0 %v358, 124
      %v399 = vpop.permute.xlu0 %398
      %400 = vrot.lane.b32.xlu0 %v359, 124
      %v401 = vpop.permute.xlu0 %400
      %402 = vrot.lane.b32.xlu0 %v360, 124
      %v403 = vpop.permute.xlu0 %402
      %404 = vrot.lane.b32.xlu0 %v361, 124
      %v405 = vpop.permute.xlu0 %404
      %406 = vrot.lane.b32.xlu0 %v362, 124
      %v407 = vpop.permute.xlu0 %406
      %408 = vrot.lane.b32.xlu0 %v363, 124
      %v409 = vpop.permute.xlu0 %408
      %410 = vrot.lane.b32.xlu0 %v364, 124
      %v411 = vpop.permute.xlu0 %410
      %412 = vrot.lane.b32.xlu0 %v365, 124
      %v413 = vpop.permute.xlu0 %412
      %v430 = vadd.f32 %v331, %v383
      %v431 = vadd.f32 %v332, %v385
      %v432 = vadd.f32 %v333, %v387
      %v433 = vadd.f32 %v334, %v389
      %v434 = vadd.f32 %v335, %v391
      %v435 = vadd.f32 %v336, %v393
      %v436 = vadd.f32 %v337, %v395
      %v437 = vadd.f32 %v338, %v397
      %v438 = vadd.f32 %v339, %v399
      %v439 = vadd.f32 %v340, %v401
      %v440 = vadd.f32 %v341, %v403
      %v441 = vadd.f32 %v342, %v405
      %v442 = vadd.f32 %v343, %v407
      %v443 = vadd.f32 %v344, %v409
      %v444 = vadd.f32 %v345, %v411
      %v445 = vadd.f32 %v346, %v413
      %s446 = sadd.s32 %s194, 3
      %s447 = sld [smem:[#allocation8 + %s446]]
      %v448 = vstv %s447
      %v449 = vmul.f32 %v448, %v199
      %v450 = vmul.f32 %v448, %v200
      %v451 = vmul.f32 %v448, %v201
      %v452 = vmul.f32 %v448, %v202
      %v453 = vmul.f32 %v448, %v203
      %v454 = vmul.f32 %v448, %v204
      %v455 = vmul.f32 %v448, %v205
      %v456 = vmul.f32 %v448, %v206
      %v457 = vmul.f32 %v448, %v207
      %v458 = vmul.f32 %v448, %v208
      %v459 = vmul.f32 %v448, %v209
      %v460 = vmul.f32 %v448, %v210
      %v461 = vmul.f32 %v448, %v211
      %v462 = vmul.f32 %v448, %v212
      %v463 = vmul.f32 %v448, %v213
      %v464 = vmul.f32 %v448, %v214
      %481 = vrot.lane.b32.xlu0 %v449, 122
      %v482 = vpop.permute.xlu0 %481
      %483 = vrot.lane.b32.xlu0 %v450, 122
      %v484 = vpop.permute.xlu0 %483
      %485 = vrot.lane.b32.xlu0 %v451, 122
      %v486 = vpop.permute.xlu0 %485
      %487 = vrot.lane.b32.xlu0 %v452, 122
      %v488 = vpop.permute.xlu0 %487
      %489 = vrot.lane.b32.xlu0 %v453, 122
      %v490 = vpop.permute.xlu0 %489
      %491 = vrot.lane.b32.xlu0 %v454, 122
      %v492 = vpop.permute.xlu0 %491
      %493 = vrot.lane.b32.xlu0 %v455, 122
      %v494 = vpop.permute.xlu0 %493
      %495 = vrot.lane.b32.xlu0 %v456, 122
      %v496 = vpop.permute.xlu0 %495
      %497 = vrot.lane.b32.xlu0 %v457, 122
      %v498 = vpop.permute.xlu0 %497
      %499 = vrot.lane.b32.xlu0 %v458, 122
      %v500 = vpop.permute.xlu0 %499
      %501 = vrot.lane.b32.xlu0 %v459, 122
      %v502 = vpop.permute.xlu0 %501
      %503 = vrot.lane.b32.xlu0 %v460, 122
      %v504 = vpop.permute.xlu0 %503
      %505 = vrot.lane.b32.xlu0 %v461, 122
      %v506 = vpop.permute.xlu0 %505
      %507 = vrot.lane.b32.xlu0 %v462, 122
      %v508 = vpop.permute.xlu0 %507
      %509 = vrot.lane.b32.xlu0 %v463, 122
      %v510 = vpop.permute.xlu0 %509
      %511 = vrot.lane.b32.xlu0 %v464, 122
      %v512 = vpop.permute.xlu0 %511
      %v529 = vadd.f32 %v430, %v482
      %v530 = vadd.f32 %v431, %v484
      %v531 = vadd.f32 %v432, %v486
      %v532 = vadd.f32 %v433, %v488
      %v533 = vadd.f32 %v434, %v490
      %v534 = vadd.f32 %v435, %v492
      %v535 = vadd.f32 %v436, %v494
      %v536 = vadd.f32 %v437, %v496
      %v537 = vadd.f32 %v438, %v498
      %v538 = vadd.f32 %v439, %v500
      %v539 = vadd.f32 %v440, %v502
      %v540 = vadd.f32 %v441, %v504
      %v541 = vadd.f32 %v442, %v506
      %v542 = vadd.f32 %v443, %v508
      %v543 = vadd.f32 %v444, %v510
      %v544 = vadd.f32 %v445, %v512
      %s545 = sadd.s32 %s194, 4
      %s546 = sld [smem:[#allocation8 + %s545]]
      %v547 = vstv %s546
      %v548 = vmul.f32 %v547, %v199
      %v549 = vmul.f32 %v547, %v200
      %v550 = vmul.f32 %v547, %v201
      %v551 = vmul.f32 %v547, %v202
      %v552 = vmul.f32 %v547, %v203
      %v553 = vmul.f32 %v547, %v204
      %v554 = vmul.f32 %v547, %v205
      %v555 = vmul.f32 %v547, %v206
      %v556 = vmul.f32 %v547, %v207
      %v557 = vmul.f32 %v547, %v208
      %v558 = vmul.f32 %v547, %v209
      %v559 = vmul.f32 %v547, %v210
      %v560 = vmul.f32 %v547, %v211
      %v561 = vmul.f32 %v547, %v212
      %v562 = vmul.f32 %v547, %v213
      %v563 = vmul.f32 %v547, %v214
      %580 = vrot.lane.b32.xlu0 %v548, 120
      %v581 = vpop.permute.xlu0 %580
      %582 = vrot.lane.b32.xlu0 %v549, 120
      %v583 = vpop.permute.xlu0 %582
      %584 = vrot.lane.b32.xlu0 %v550, 120
      %v585 = vpop.permute.xlu0 %584
      %586 = vrot.lane.b32.xlu0 %v551, 120
      %v587 = vpop.permute.xlu0 %586
      %588 = vrot.lane.b32.xlu0 %v552, 120
      %v589 = vpop.permute.xlu0 %588
      %590 = vrot.lane.b32.xlu0 %v553, 120
      %v591 = vpop.permute.xlu0 %590
      %592 = vrot.lane.b32.xlu0 %v554, 120
      %v593 = vpop.permute.xlu0 %592
      %594 = vrot.lane.b32.xlu0 %v555, 120
      %v595 = vpop.permute.xlu0 %594
      %596 = vrot.lane.b32.xlu0 %v556, 120
      %v597 = vpop.permute.xlu0 %596
      %598 = vrot.lane.b32.xlu0 %v557, 120
      %v599 = vpop.permute.xlu0 %598
      %600 = vrot.lane.b32.xlu0 %v558, 120
      %v601 = vpop.permute.xlu0 %600
      %602 = vrot.lane.b32.xlu0 %v559, 120
      %v603 = vpop.permute.xlu0 %602
      %604 = vrot.lane.b32.xlu0 %v560, 120
      %v605 = vpop.permute.xlu0 %604
      %606 = vrot.lane.b32.xlu0 %v561, 120
      %v607 = vpop.permute.xlu0 %606
      %608 = vrot.lane.b32.xlu0 %v562, 120
      %v609 = vpop.permute.xlu0 %608
      %610 = vrot.lane.b32.xlu0 %v563, 120
      %v611 = vpop.permute.xlu0 %610
      %v628 = vadd.f32 %v529, %v581
      %v629 = vadd.f32 %v530, %v583
      %v630 = vadd.f32 %v531, %v585
      %v631 = vadd.f32 %v532, %v587
      %v632 = vadd.f32 %v533, %v589
      %v633 = vadd.f32 %v534, %v591
      %v634 = vadd.f32 %v535, %v593
      %v635 = vadd.f32 %v536, %v595
      %v636 = vadd.f32 %v537, %v597
      %v637 = vadd.f32 %v538, %v599
      %v638 = vadd.f32 %v539, %v601
      %v639 = vadd.f32 %v540, %v603
      %v640 = vadd.f32 %v541, %v605
      %v641 = vadd.f32 %v542, %v607
      %v642 = vadd.f32 %v543, %v609
      %v643 = vadd.f32 %v544, %v611
    $region30: #{tpu_custom_call.1} parent=1 // loop_footer
      %s177 = sadd.s32 1, %s173
    $region31: #{tpu_custom_call.1} parent=1 // loop_footer_branch
      %172 = sbr.rel target = $region27
    $region32: #{tpu_custom_call.1} parent=1 // loop_exit
      _
    %v644 = vld [vmem:[%s154] sm:$0xff]
    %v645 = vld [vmem:[%s154 + $0x8] sm:$0xff]
    %v646 = vld [vmem:[%s154 + $0x10] sm:$0xff]
    %v647 = vld [vmem:[%s154 + $0x18] sm:$0xff]
    %v648 = vld [vmem:[%s154 + $0x20] sm:$0xff]
    %v649 = vld [vmem:[%s154 + $0x28] sm:$0xff]
    %v650 = vld [vmem:[%s154 + $0x30] sm:$0xff]
    %v651 = vld [vmem:[%s154 + $0x38] sm:$0xff]
    %v652 = vld [vmem:[%s154 + $0x40] sm:$0xff]
    %v653 = vld [vmem:[%s154 + $0x48] sm:$0xff]
    %v654 = vld [vmem:[%s154 + $0x50] sm:$0xff]
    %v655 = vld [vmem:[%s154 + $0x58] sm:$0xff]
    %v656 = vld [vmem:[%s154 + $0x60] sm:$0xff]
    %v657 = vld [vmem:[%s154 + $0x68] sm:$0xff]
    %v658 = vld [vmem:[%s154 + $0x70] sm:$0xff]
    %v659 = vld [vmem:[%s154 + $0x78] sm:$0xff]
    %s660 = ssub.f32 1.0, %s47
    %s661 = smul.f32 %s660, %s45
    %v662 = vstv %s661
    %v663 = vmul.f32 %v662, %v178
    %v664 = vmul.f32 %v662, %v179
    %v665 = vmul.f32 %v662, %v180
    %v666 = vmul.f32 %v662, %v181
    %v667 = vmul.f32 %v662, %v182
    %v668 = vmul.f32 %v662, %v183
    %v669 = vmul.f32 %v662, %v184
    %v670 = vmul.f32 %v662, %v185
    %v671 = vmul.f32 %v662, %v186
    %v672 = vmul.f32 %v662, %v187
    %v673 = vmul.f32 %v662, %v188
    %v674 = vmul.f32 %v662, %v189
    %v675 = vmul.f32 %v662, %v190
    %v676 = vmul.f32 %v662, %v191
    %v677 = vmul.f32 %v662, %v192
    %v678 = vmul.f32 %v662, %v193
    %695 = vrot.lane.b32.xlu0 %v663, 4
    %v696 = vpop.permute.xlu0 %695
    %697 = vrot.lane.b32.xlu0 %v664, 4
    %v698 = vpop.permute.xlu0 %697
    %699 = vrot.lane.b32.xlu0 %v665, 4
    %v700 = vpop.permute.xlu0 %699
    %701 = vrot.lane.b32.xlu0 %v666, 4
    %v702 = vpop.permute.xlu0 %701
    %703 = vrot.lane.b32.xlu0 %v667, 4
    %v704 = vpop.permute.xlu0 %703
    %705 = vrot.lane.b32.xlu0 %v668, 4
    %v706 = vpop.permute.xlu0 %705
    %707 = vrot.lane.b32.xlu0 %v669, 4
    %v708 = vpop.permute.xlu0 %707
    %709 = vrot.lane.b32.xlu0 %v670, 4
    %v710 = vpop.permute.xlu0 %709
    %711 = vrot.lane.b32.xlu0 %v671, 4
    %v712 = vpop.permute.xlu0 %711
    %713 = vrot.lane.b32.xlu0 %v672, 4
    %v714 = vpop.permute.xlu0 %713
    %715 = vrot.lane.b32.xlu0 %v673, 4
    %v716 = vpop.permute.xlu0 %715
    %717 = vrot.lane.b32.xlu0 %v674, 4
    %v718 = vpop.permute.xlu0 %717
    %719 = vrot.lane.b32.xlu0 %v675, 4
    %v720 = vpop.permute.xlu0 %719
    %721 = vrot.lane.b32.xlu0 %v676, 4
    %v722 = vpop.permute.xlu0 %721
    %723 = vrot.lane.b32.xlu0 %v677, 4
    %v724 = vpop.permute.xlu0 %723
    %725 = vrot.lane.b32.xlu0 %v678, 4
    %v726 = vpop.permute.xlu0 %725
    %v743 = vadd.f32 %v644, %v696
    %v744 = vadd.f32 %v645, %v698
    %v745 = vadd.f32 %v646, %v700
    %v746 = vadd.f32 %v647, %v702
    %v747 = vadd.f32 %v648, %v704
    %v748 = vadd.f32 %v649, %v706
    %v749 = vadd.f32 %v650, %v708
    %v750 = vadd.f32 %v651, %v710
    %v751 = vadd.f32 %v652, %v712
    %v752 = vadd.f32 %v653, %v714
    %v753 = vadd.f32 %v654, %v716
    %v754 = vadd.f32 %v655, %v718
    %v755 = vadd.f32 %v656, %v720
    %v756 = vadd.f32 %v657, %v722
    %v757 = vadd.f32 %v658, %v724
    %v758 = vadd.f32 %v659, %v726
    %775 = vrot.lane.b32.xlu0 %v743, 122
    %v776 = vpop.permute.xlu0 %775
    %777 = vrot.lane.b32.xlu0 %v744, 122
    %v778 = vpop.permute.xlu0 %777
    %779 = vrot.lane.b32.xlu0 %v745, 122
    %v780 = vpop.permute.xlu0 %779
    %781 = vrot.lane.b32.xlu0 %v746, 122
    %v782 = vpop.permute.xlu0 %781
    %783 = vrot.lane.b32.xlu0 %v747, 122
    %v784 = vpop.permute.xlu0 %783
    %785 = vrot.lane.b32.xlu0 %v748, 122
    %v786 = vpop.permute.xlu0 %785
    %787 = vrot.lane.b32.xlu0 %v749, 122
    %v788 = vpop.permute.xlu0 %787
    %789 = vrot.lane.b32.xlu0 %v750, 122
    %v790 = vpop.permute.xlu0 %789
    %791 = vrot.lane.b32.xlu0 %v751, 122
    %v792 = vpop.permute.xlu0 %791
    %793 = vrot.lane.b32.xlu0 %v752, 122
    %v794 = vpop.permute.xlu0 %793
    %795 = vrot.lane.b32.xlu0 %v753, 122
    %v796 = vpop.permute.xlu0 %795
    %797 = vrot.lane.b32.xlu0 %v754, 122
    %v798 = vpop.permute.xlu0 %797
    %799 = vrot.lane.b32.xlu0 %v755, 122
    %v800 = vpop.permute.xlu0 %799
    %801 = vrot.lane.b32.xlu0 %v756, 122
    %v802 = vpop.permute.xlu0 %801
    %803 = vrot.lane.b32.xlu0 %v757, 122
    %v804 = vpop.permute.xlu0 %803
    %805 = vrot.lane.b32.xlu0 %v758, 122
    %v806 = vpop.permute.xlu0 %805
    %vm823 = vcmask 261120
    %824 = vst.msk [vmem:[#allocation9] sm:$0xff] %vm823, %v776
    %825 = vst.msk [vmem:[#allocation9 + $0x8] sm:$0xff] %vm823, %v778
    %826 = vst.msk [vmem:[#allocation9 + $0x10] sm:$0xff] %vm823, %v780
    %827 = vst.msk [vmem:[#allocation9 + $0x18] sm:$0xff] %vm823, %v782
    %828 = vst.msk [vmem:[#allocation9 + $0x20] sm:$0xff] %vm823, %v784
    %829 = vst.msk [vmem:[#allocation9 + $0x28] sm:$0xff] %vm823, %v786
    %830 = vst.msk [vmem:[#allocation9 + $0x30] sm:$0xff] %vm823, %v788
    %831 = vst.msk [vmem:[#allocation9 + $0x38] sm:$0xff] %vm823, %v790
    %832 = vst.msk [vmem:[#allocation9 + $0x40] sm:$0xff] %vm823, %v792
    %833 = vst.msk [vmem:[#allocation9 + $0x48] sm:$0xff] %vm823, %v794
    %834 = vst.msk [vmem:[#allocation9 + $0x50] sm:$0xff] %vm823, %v796
    %835 = vst.msk [vmem:[#allocation9 + $0x58] sm:$0xff] %vm823, %v798
    %836 = vst.msk [vmem:[#allocation9 + $0x60] sm:$0xff] %vm823, %v800
    %837 = vst.msk [vmem:[#allocation9 + $0x68] sm:$0xff] %vm823, %v802
    %838 = vst.msk [vmem:[#allocation9 + $0x70] sm:$0xff] %vm823, %v804
    %839 = vst.msk [vmem:[#allocation9 + $0x78] sm:$0xff] %vm823, %v806
    %v840 = vld [vmem:[#allocation2] sm:$0xff]
    %v841 = vld [vmem:[#allocation2 + $0x8] sm:$0xff]
    %v842 = vld [vmem:[#allocation2 + $0x10] sm:$0xff]
    %v843 = vld [vmem:[#allocation2 + $0x18] sm:$0xff]
    %v844 = vld [vmem:[#allocation2 + $0x20] sm:$0xff]
    %v845 = vld [vmem:[#allocation2 + $0x28] sm:$0xff]
    %v846 = vld [vmem:[#allocation2 + $0x30] sm:$0xff]
    %v847 = vld [vmem:[#allocation2 + $0x38] sm:$0xff]
    %v848 = vld [vmem:[#allocation2 + $0x40] sm:$0xff]
    %v849 = vld [vmem:[#allocation2 + $0x48] sm:$0xff]
    %v850 = vld [vmem:[#allocation2 + $0x50] sm:$0xff]
    %v851 = vld [vmem:[#allocation2 + $0x58] sm:$0xff]
    %v852 = vld [vmem:[#allocation2 + $0x60] sm:$0xff]
    %v853 = vld [vmem:[#allocation2 + $0x68] sm:$0xff]
    %v854 = vld [vmem:[#allocation2 + $0x70] sm:$0xff]
    %v855 = vld [vmem:[#allocation2 + $0x78] sm:$0xff]
    %v856 = vld [vmem:[#allocation2 + $0x80] sm:$0xff]
    %v857 = vld [vmem:[#allocation2 + $0x88] sm:$0xff]
    %v858 = vld [vmem:[#allocation2 + $0x90] sm:$0xff]
    %v859 = vld [vmem:[#allocation2 + $0x98] sm:$0xff]
    %v860 = vld [vmem:[#allocation2 + $0xa0] sm:$0xff]
    %v861 = vld [vmem:[#allocation2 + $0xa8] sm:$0xff]
    %v862 = vsel %vm51, %v840, 0.0
    %v863 = vrot.slane %v862, 4
    %v864 = vadd.f32 %v862, %v863
    %v865 = vrot.slane %v864, 2
    %v866 = vadd.f32 %v864, %v865
    %v867 = vrot.slane %v866, 1
    %v868 = vadd.f32 %v866, %v867
    %v869 = vsel %vm51, %v841, 0.0
    %v870 = vrot.slane %v869, 4
    %v871 = vadd.f32 %v869, %v870
    %v872 = vrot.slane %v871, 2
    %v873 = vadd.f32 %v871, %v872
    %v874 = vrot.slane %v873, 1
    %v875 = vadd.f32 %v873, %v874
    %v876 = vsel %vm51, %v842, 0.0
    %v877 = vrot.slane %v876, 4
    %v878 = vadd.f32 %v876, %v877
    %v879 = vrot.slane %v878, 2
    %v880 = vadd.f32 %v878, %v879
    %v881 = vrot.slane %v880, 1
    %v882 = vadd.f32 %v880, %v881
    %v883 = vsel %vm51, %v843, 0.0
    %v884 = vrot.slane %v883, 4
    %v885 = vadd.f32 %v883, %v884
    %v886 = vrot.slane %v885, 2
    %v887 = vadd.f32 %v885, %v886
    %v888 = vrot.slane %v887, 1
    %v889 = vadd.f32 %v887, %v888
    %v890 = vsel %vm51, %v844, 0.0
    %v891 = vrot.slane %v890, 4
    %v892 = vadd.f32 %v890, %v891
    %v893 = vrot.slane %v892, 2
    %v894 = vadd.f32 %v892, %v893
    %v895 = vrot.slane %v894, 1
    %v896 = vadd.f32 %v894, %v895
    %v897 = vsel %vm51, %v845, 0.0
    %v898 = vrot.slane %v897, 4
    %v899 = vadd.f32 %v897, %v898
    %v900 = vrot.slane %v899, 2
    %v901 = vadd.f32 %v899, %v900
    %v902 = vrot.slane %v901, 1
    %v903 = vadd.f32 %v901, %v902
    %v904 = vsel %vm51, %v846, 0.0
    %v905 = vrot.slane %v904, 4
    %v906 = vadd.f32 %v904, %v905
    %v907 = vrot.slane %v906, 2
    %v908 = vadd.f32 %v906, %v907
    %v909 = vrot.slane %v908, 1
    %v910 = vadd.f32 %v908, %v909
    %v911 = vsel %vm51, %v847, 0.0
    %v912 = vrot.slane %v911, 4
    %v913 = vadd.f32 %v911, %v912
    %v914 = vrot.slane %v913, 2
    %v915 = vadd.f32 %v913, %v914
    %v916 = vrot.slane %v915, 1
    %v917 = vadd.f32 %v915, %v916
    %v918 = vsel %vm51, %v848, 0.0
    %v919 = vrot.slane %v918, 4
    %v920 = vadd.f32 %v918, %v919
    %v921 = vrot.slane %v920, 2
    %v922 = vadd.f32 %v920, %v921
    %v923 = vrot.slane %v922, 1
    %v924 = vadd.f32 %v922, %v923
    %v925 = vsel %vm51, %v849, 0.0
    %v926 = vrot.slane %v925, 4
    %v927 = vadd.f32 %v925, %v926
    %v928 = vrot.slane %v927, 2
    %v929 = vadd.f32 %v927, %v928
    %v930 = vrot.slane %v929, 1
    %v931 = vadd.f32 %v929, %v930
    %v932 = vsel %vm51, %v850, 0.0
    %v933 = vrot.slane %v932, 4
    %v934 = vadd.f32 %v932, %v933
    %v935 = vrot.slane %v934, 2
    %v936 = vadd.f32 %v934, %v935
    %v937 = vrot.slane %v936, 1
    %v938 = vadd.f32 %v936, %v937
    %v939 = vsel %vm51, %v851, 0.0
    %v940 = vrot.slane %v939, 4
    %v941 = vadd.f32 %v939, %v940
    %v942 = vrot.slane %v941, 2
    %v943 = vadd.f32 %v941, %v942
    %v944 = vrot.slane %v943, 1
    %v945 = vadd.f32 %v943, %v944
    %v946 = vsel %vm51, %v852, 0.0
    %v947 = vrot.slane %v946, 4
    %v948 = vadd.f32 %v946, %v947
    %v949 = vrot.slane %v948, 2
    %v950 = vadd.f32 %v948, %v949
    %v951 = vrot.slane %v950, 1
    %v952 = vadd.f32 %v950, %v951
    %v953 = vsel %vm51, %v853, 0.0
    %v954 = vrot.slane %v953, 4
    %v955 = vadd.f32 %v953, %v954
    %v956 = vrot.slane %v955, 2
    %v957 = vadd.f32 %v955, %v956
    %v958 = vrot.slane %v957, 1
    %v959 = vadd.f32 %v957, %v958
    %v960 = vsel %vm51, %v854, 0.0
    %v961 = vrot.slane %v960, 4
    %v962 = vadd.f32 %v960, %v961
    %v963 = vrot.slane %v962, 2
    %v964 = vadd.f32 %v962, %v963
    %v965 = vrot.slane %v964, 1
    %v966 = vadd.f32 %v964, %v965
    %v967 = vsel %vm51, %v855, 0.0
    %v968 = vrot.slane %v967, 4
    %v969 = vadd.f32 %v967, %v968
    %v970 = vrot.slane %v969, 2
    %v971 = vadd.f32 %v969, %v970
    %v972 = vrot.slane %v971, 1
    %v973 = vadd.f32 %v971, %v972
    %v974 = vsel %vm51, %v856, 0.0
    %v975 = vrot.slane %v974, 4
    %v976 = vadd.f32 %v974, %v975
    %v977 = vrot.slane %v976, 2
    %v978 = vadd.f32 %v976, %v977
    %v979 = vrot.slane %v978, 1
    %v980 = vadd.f32 %v978, %v979
    %v981 = vsel %vm51, %v857, 0.0
    %v982 = vrot.slane %v981, 4
    %v983 = vadd.f32 %v981, %v982
    %v984 = vrot.slane %v983, 2
    %v985 = vadd.f32 %v983, %v984
    %v986 = vrot.slane %v985, 1
    %v987 = vadd.f32 %v985, %v986
    %v988 = vsel %vm51, %v858, 0.0
    %v989 = vrot.slane %v988, 4
    %v990 = vadd.f32 %v988, %v989
    %v991 = vrot.slane %v990, 2
    %v992 = vadd.f32 %v990, %v991
    %v993 = vrot.slane %v992, 1
    %v994 = vadd.f32 %v992, %v993
    %v995 = vsel %vm51, %v859, 0.0
    %v996 = vrot.slane %v995, 4
    %v997 = vadd.f32 %v995, %v996
    %v998 = vrot.slane %v997, 2
    %v999 = vadd.f32 %v997, %v998
    %v1000 = vrot.slane %v999, 1
    %v1001 = vadd.f32 %v999, %v1000
    %v1002 = vsel %vm51, %v860, 0.0
    %v1003 = vrot.slane %v1002, 4
    %v1004 = vadd.f32 %v1002, %v1003
    %v1005 = vrot.slane %v1004, 2
    %v1006 = vadd.f32 %v1004, %v1005
    %v1007 = vrot.slane %v1006, 1
    %v1008 = vadd.f32 %v1006, %v1007
    %v1009 = vsel %vm51, %v861, 0.0
    %v1010 = vrot.slane %v1009, 4
    %v1011 = vadd.f32 %v1009, %v1010
    %v1012 = vrot.slane %v1011, 2
    %v1013 = vadd.f32 %v1011, %v1012
    %v1014 = vrot.slane %v1013, 1
    %v1015 = vadd.f32 %v1013, %v1014
    %v1016 = vrcp.pop 8.0
    %v1017 = vmul.f32 %v868, %v1016
    %v1018 = vmul.f32 %v875, %v1016
    %v1019 = vmul.f32 %v882, %v1016
    %v1020 = vmul.f32 %v889, %v1016
    %v1021 = vmul.f32 %v896, %v1016
    %v1022 = vmul.f32 %v903, %v1016
    %v1023 = vmul.f32 %v910, %v1016
    %v1024 = vmul.f32 %v917, %v1016
    %v1025 = vmul.f32 %v924, %v1016
    %v1026 = vmul.f32 %v931, %v1016
    %v1027 = vmul.f32 %v938, %v1016
    %v1028 = vmul.f32 %v945, %v1016
    %v1029 = vmul.f32 %v952, %v1016
    %v1030 = vmul.f32 %v959, %v1016
    %v1031 = vmul.f32 %v966, %v1016
    %v1032 = vmul.f32 %v973, %v1016
    %v1033 = vmul.f32 %v980, %v1016
    %v1034 = vmul.f32 %v987, %v1016
    %v1035 = vmul.f32 %v994, %v1016
    %v1036 = vmul.f32 %v1001, %v1016
    %v1037 = vmul.f32 %v1008, %v1016
    %v1038 = vmul.f32 %v1015, %v1016
    %v1039 = vsel %vm51, %v840, -inf
    %v1040 = vrot.slane %v1039, 4
    %v1041 = vmax.f32 %v1039, %v1040
    %v1042 = vrot.slane %v1041, 2
    %v1043 = vmax.f32 %v1041, %v1042
    %v1044 = vrot.slane %v1043, 1
    %v1045 = vmax.f32 %v1043, %v1044
    %v1046 = vsel %vm51, %v841, -inf
    %v1047 = vrot.slane %v1046, 4
    %v1048 = vmax.f32 %v1046, %v1047
    %v1049 = vrot.slane %v1048, 2
    %v1050 = vmax.f32 %v1048, %v1049
    %v1051 = vrot.slane %v1050, 1
    %v1052 = vmax.f32 %v1050, %v1051
    %v1053 = vsel %vm51, %v842, -inf
    %v1054 = vrot.slane %v1053, 4
    %v1055 = vmax.f32 %v1053, %v1054
    %v1056 = vrot.slane %v1055, 2
    %v1057 = vmax.f32 %v1055, %v1056
    %v1058 = vrot.slane %v1057, 1
    %v1059 = vmax.f32 %v1057, %v1058
    %v1060 = vsel %vm51, %v843, -inf
    %v1061 = vrot.slane %v1060, 4
    %v1062 = vmax.f32 %v1060, %v1061
    %v1063 = vrot.slane %v1062, 2
    %v1064 = vmax.f32 %v1062, %v1063
    %v1065 = vrot.slane %v1064, 1
    %v1066 = vmax.f32 %v1064, %v1065
    %v1067 = vsel %vm51, %v844, -inf
    %v1068 = vrot.slane %v1067, 4
    %v1069 = vmax.f32 %v1067, %v1068
    %v1070 = vrot.slane %v1069, 2
    %v1071 = vmax.f32 %v1069, %v1070
    %v1072 = vrot.slane %v1071, 1
    %v1073 = vmax.f32 %v1071, %v1072
    %v1074 = vsel %vm51, %v845, -inf
    %v1075 = vrot.slane %v1074, 4
    %v1076 = vmax.f32 %v1074, %v1075
    %v1077 = vrot.slane %v1076, 2
    %v1078 = vmax.f32 %v1076, %v1077
    %v1079 = vrot.slane %v1078, 1
    %v1080 = vmax.f32 %v1078, %v1079
    %v1081 = vsel %vm51, %v846, -inf
    %v1082 = vrot.slane %v1081, 4
    %v1083 = vmax.f32 %v1081, %v1082
    %v1084 = vrot.slane %v1083, 2
    %v1085 = vmax.f32 %v1083, %v1084
    %v1086 = vrot.slane %v1085, 1
    %v1087 = vmax.f32 %v1085, %v1086
    %v1088 = vsel %vm51, %v847, -inf
    %v1089 = vrot.slane %v1088, 4
    %v1090 = vmax.f32 %v1088, %v1089
    %v1091 = vrot.slane %v1090, 2
    %v1092 = vmax.f32 %v1090, %v1091
    %v1093 = vrot.slane %v1092, 1
    %v1094 = vmax.f32 %v1092, %v1093
    %v1095 = vsel %vm51, %v848, -inf
    %v1096 = vrot.slane %v1095, 4
    %v1097 = vmax.f32 %v1095, %v1096
    %v1098 = vrot.slane %v1097, 2
    %v1099 = vmax.f32 %v1097, %v1098
    %v1100 = vrot.slane %v1099, 1
    %v1101 = vmax.f32 %v1099, %v1100
    %v1102 = vsel %vm51, %v849, -inf
    %v1103 = vrot.slane %v1102, 4
    %v1104 = vmax.f32 %v1102, %v1103
    %v1105 = vrot.slane %v1104, 2
    %v1106 = vmax.f32 %v1104, %v1105
    %v1107 = vrot.slane %v1106, 1
    %v1108 = vmax.f32 %v1106, %v1107
    %v1109 = vsel %vm51, %v850, -inf
    %v1110 = vrot.slane %v1109, 4
    %v1111 = vmax.f32 %v1109, %v1110
    %v1112 = vrot.slane %v1111, 2
    %v1113 = vmax.f32 %v1111, %v1112
    %v1114 = vrot.slane %v1113, 1
    %v1115 = vmax.f32 %v1113, %v1114
    %v1116 = vsel %vm51, %v851, -inf
    %v1117 = vrot.slane %v1116, 4
    %v1118 = vmax.f32 %v1116, %v1117
    %v1119 = vrot.slane %v1118, 2
    %v1120 = vmax.f32 %v1118, %v1119
    %v1121 = vrot.slane %v1120, 1
    %v1122 = vmax.f32 %v1120, %v1121
    %v1123 = vsel %vm51, %v852, -inf
    %v1124 = vrot.slane %v1123, 4
    %v1125 = vmax.f32 %v1123, %v1124
    %v1126 = vrot.slane %v1125, 2
    %v1127 = vmax.f32 %v1125, %v1126
    %v1128 = vrot.slane %v1127, 1
    %v1129 = vmax.f32 %v1127, %v1128
    %v1130 = vsel %vm51, %v853, -inf
    %v1131 = vrot.slane %v1130, 4
    %v1132 = vmax.f32 %v1130, %v1131
    %v1133 = vrot.slane %v1132, 2
    %v1134 = vmax.f32 %v1132, %v1133
    %v1135 = vrot.slane %v1134, 1
    %v1136 = vmax.f32 %v1134, %v1135
    %v1137 = vsel %vm51, %v854, -inf
    %v1138 = vrot.slane %v1137, 4
    %v1139 = vmax.f32 %v1137, %v1138
    %v1140 = vrot.slane %v1139, 2
    %v1141 = vmax.f32 %v1139, %v1140
    %v1142 = vrot.slane %v1141, 1
    %v1143 = vmax.f32 %v1141, %v1142
    %v1144 = vsel %vm51, %v855, -inf
    %v1145 = vrot.slane %v1144, 4
    %v1146 = vmax.f32 %v1144, %v1145
    %v1147 = vrot.slane %v1146, 2
    %v1148 = vmax.f32 %v1146, %v1147
    %v1149 = vrot.slane %v1148, 1
    %v1150 = vmax.f32 %v1148, %v1149
    %v1151 = vsel %vm51, %v856, -inf
    %v1152 = vrot.slane %v1151, 4
    %v1153 = vmax.f32 %v1151, %v1152
    %v1154 = vrot.slane %v1153, 2
    %v1155 = vmax.f32 %v1153, %v1154
    %v1156 = vrot.slane %v1155, 1
    %v1157 = vmax.f32 %v1155, %v1156
    %v1158 = vsel %vm51, %v857, -inf
    %v1159 = vrot.slane %v1158, 4
    %v1160 = vmax.f32 %v1158, %v1159
    %v1161 = vrot.slane %v1160, 2
    %v1162 = vmax.f32 %v1160, %v1161
    %v1163 = vrot.slane %v1162, 1
    %v1164 = vmax.f32 %v1162, %v1163
    %v1165 = vsel %vm51, %v858, -inf
    %v1166 = vrot.slane %v1165, 4
    %v1167 = vmax.f32 %v1165, %v1166
    %v1168 = vrot.slane %v1167, 2
    %v1169 = vmax.f32 %v1167, %v1168
    %v1170 = vrot.slane %v1169, 1
    %v1171 = vmax.f32 %v1169, %v1170
    %v1172 = vsel %vm51, %v859, -inf
    %v1173 = vrot.slane %v1172, 4
    %v1174 = vmax.f32 %v1172, %v1173
    %v1175 = vrot.slane %v1174, 2
    %v1176 = vmax.f32 %v1174, %v1175
    %v1177 = vrot.slane %v1176, 1
    %v1178 = vmax.f32 %v1176, %v1177
    %v1179 = vsel %vm51, %v860, -inf
    %v1180 = vrot.slane %v1179, 4
    %v1181 = vmax.f32 %v1179, %v1180
    %v1182 = vrot.slane %v1181, 2
    %v1183 = vmax.f32 %v1181, %v1182
    %v1184 = vrot.slane %v1183, 1
    %v1185 = vmax.f32 %v1183, %v1184
    %v1186 = vsel %vm51, %v861, -inf
    %v1187 = vrot.slane %v1186, 4
    %v1188 = vmax.f32 %v1186, %v1187
    %v1189 = vrot.slane %v1188, 2
    %v1190 = vmax.f32 %v1188, %v1189
    %v1191 = vrot.slane %v1190, 1
    %v1192 = vmax.f32 %v1190, %v1191
    %vm1193 = vcmask 1040384
    %v1194 = vsel %vm1193, %v1017, %v1045
    %v1195 = vsel %vm1193, %v1018, %v1052
    %v1196 = vsel %vm1193, %v1019, %v1059
    %v1197 = vsel %vm1193, %v1020, %v1066
    %v1198 = vsel %vm1193, %v1021, %v1073
    %v1199 = vsel %vm1193, %v1022, %v1080
    %v1200 = vsel %vm1193, %v1023, %v1087
    %v1201 = vsel %vm1193, %v1024, %v1094
    %v1202 = vsel %vm1193, %v1025, %v1101
    %v1203 = vsel %vm1193, %v1026, %v1108
    %v1204 = vsel %vm1193, %v1027, %v1115
    %v1205 = vsel %vm1193, %v1028, %v1122
    %v1206 = vsel %vm1193, %v1029, %v1129
    %v1207 = vsel %vm1193, %v1030, %v1136
    %v1208 = vsel %vm1193, %v1031, %v1143
    %v1209 = vsel %vm1193, %v1032, %v1150
    %v1210 = vsel %vm1193, %v1033, %v1157
    %v1211 = vsel %vm1193, %v1034, %v1164
    %v1212 = vsel %vm1193, %v1035, %v1171
    %v1213 = vsel %vm1193, %v1036, %v1178
    %v1214 = vsel %vm1193, %v1037, %v1185
    %v1215 = vsel %vm1193, %v1038, %v1192
    %vm1216 = vcmask 353280
    %1217 = vst.msk [vmem:[#allocation3] sm:$0x3] %vm1216, %v1194
    %1218 = vst.msk [vmem:[#allocation3 + $0x2] sm:$0x3] %vm1216, %v1195
    %1219 = vst.msk [vmem:[#allocation3 + $0x4] sm:$0x3] %vm1216, %v1196
    %1220 = vst.msk [vmem:[#allocation3 + $0x6] sm:$0x3] %vm1216, %v1197
    %1221 = vst.msk [vmem:[#allocation3 + $0x8] sm:$0x3] %vm1216, %v1198
    %1222 = vst.msk [vmem:[#allocation3 + $0xa] sm:$0x3] %vm1216, %v1199
    %1223 = vst.msk [vmem:[#allocation3 + $0xc] sm:$0x3] %vm1216, %v1200
    %1224 = vst.msk [vmem:[#allocation3 + $0xe] sm:$0x3] %vm1216, %v1201
    %1225 = vst.msk [vmem:[#allocation3 + $0x10] sm:$0x3] %vm1216, %v1202
    %1226 = vst.msk [vmem:[#allocation3 + $0x12] sm:$0x3] %vm1216, %v1203
    %1227 = vst.msk [vmem:[#allocation3 + $0x14] sm:$0x3] %vm1216, %v1204
    %1228 = vst.msk [vmem:[#allocation3 + $0x16] sm:$0x3] %vm1216, %v1205
    %1229 = vst.msk [vmem:[#allocation3 + $0x18] sm:$0x3] %vm1216, %v1206
    %1230 = vst.msk [vmem:[#allocation3 + $0x1a] sm:$0x3] %vm1216, %v1207
    %1231 = vst.msk [vmem:[#allocation3 + $0x1c] sm:$0x3] %vm1216, %v1208
    %1232 = vst.msk [vmem:[#allocation3 + $0x1e] sm:$0x3] %vm1216, %v1209
    %1233 = vst.msk [vmem:[#allocation3 + $0x20] sm:$0x3] %vm1216, %v1210
    %1234 = vst.msk [vmem:[#allocation3 + $0x22] sm:$0x3] %vm1216, %v1211
    %1235 = vst.msk [vmem:[#allocation3 + $0x24] sm:$0x3] %vm1216, %v1212
    %1236 = vst.msk [vmem:[#allocation3 + $0x26] sm:$0x3] %vm1216, %v1213
    %1237 = vst.msk [vmem:[#allocation3 + $0x28] sm:$0x3] %vm1216, %v1214
    %1238 = vst.msk [vmem:[#allocation3 + $0x2a] sm:$0x3] %vm1216, %v1215
    %v1239 = vld [vmem:[%s154] sm:$0xff]
    %v1240 = vld [vmem:[%s154 + $0x8] sm:$0xff]
    %v1241 = vld [vmem:[%s154 + $0x10] sm:$0xff]
    %v1242 = vld [vmem:[%s154 + $0x18] sm:$0xff]
    %v1243 = vld [vmem:[%s154 + $0x20] sm:$0xff]
    %v1244 = vld [vmem:[%s154 + $0x28] sm:$0xff]
    %v1245 = vld [vmem:[%s154 + $0x30] sm:$0xff]
    %v1246 = vld [vmem:[%s154 + $0x38] sm:$0xff]
    %v1247 = vld [vmem:[%s154 + $0x40] sm:$0xff]
    %v1248 = vld [vmem:[%s154 + $0x48] sm:$0xff]
    %v1249 = vld [vmem:[%s154 + $0x50] sm:$0xff]
    %v1250 = vld [vmem:[%s154 + $0x58] sm:$0xff]
    %v1251 = vld [vmem:[%s154 + $0x60] sm:$0xff]
    %v1252 = vld [vmem:[%s154 + $0x68] sm:$0xff]
    %v1253 = vld [vmem:[%s154 + $0x70] sm:$0xff]
    %v1254 = vld [vmem:[%s154 + $0x78] sm:$0xff]
    %v1255 = vsel %vm155, %v1239, 0.0
    %v1256 = vsel %vm155, %v1240, 0.0
    %v1257 = vadd.f32 %v1255, %v1256
    %v1258 = vsel %vm155, %v1241, 0.0
    %v1259 = vadd.f32 %v1257, %v1258
    %v1260 = vsel %vm155, %v1242, 0.0
    %v1261 = vadd.f32 %v1259, %v1260
    %v1262 = vsel %vm155, %v1243, 0.0
    %v1263 = vadd.f32 %v1261, %v1262
    %v1264 = vsel %vm155, %v1244, 0.0
    %v1265 = vadd.f32 %v1263, %v1264
    %v1266 = vsel %vm155, %v1245, 0.0
    %v1267 = vadd.f32 %v1265, %v1266
    %v1268 = vsel %vm155, %v1246, 0.0
    %v1269 = vadd.f32 %v1267, %v1268
    %v1270 = vsel %vm155, %v1247, 0.0
    %v1271 = vadd.f32 %v1269, %v1270
    %v1272 = vsel %vm155, %v1248, 0.0
    %v1273 = vadd.f32 %v1271, %v1272
    %v1274 = vsel %vm155, %v1249, 0.0
    %v1275 = vadd.f32 %v1273, %v1274
    %v1276 = vsel %vm155, %v1250, 0.0
    %v1277 = vadd.f32 %v1275, %v1276
    %v1278 = vsel %vm155, %v1251, 0.0
    %v1279 = vadd.f32 %v1277, %v1278
    %v1280 = vsel %vm155, %v1252, 0.0
    %v1281 = vadd.f32 %v1279, %v1280
    %v1282 = vsel %vm155, %v1253, 0.0
    %v1283 = vadd.f32 %v1281, %v1282
    %v1284 = vsel %vm155, %v1254, 0.0
    %v1285 = vadd.f32 %v1283, %v1284
    %v1286 = vlaneseq
    %v1287 = vand.u32 %v1286, 127
    %vm1288 = vcmp.lt.s32.totalorder %v1287, 0
    %v1289 = vsub.s32 0, %v1287
    %v1290 = vsel %vm1288, %v1289, %v1287
    %v1291 = vshrl.u32 %v1290, 1
    %v1292 = vand.u32 %v1290, 1
    %v1293 = vsub.s32 0, %v1292
    %v1294 = vsel %vm1288, %v1293, %v1292
    %vm1295 = vcmp.ne.s32.totalorder %v1294, 0
    %vm1296 = vcmp.lt.s32.totalorder %v1294, 0
    %vm1297 = vmand %vm1296, %vm1295
    %v1298 = vadd.s32 %v1294, 2
    %v1299 = vsel %vm1297, %v1298, %v1294
    %vm1300 = vcmp.eq.s32.totalorder %v1299, 0
    %v1301 = vsel %vm1300, 1, 0
    %v1302 = vcvt.s32.f32 %v1301
    %v1303 = vsub.f32 1.0, %v1302
    %s1304 = scalar_lea.vmem %s1, 16
    %v1305 = vld [vmem:[%s1304] sm:$0xff]
    %v1306 = vld [vmem:[%s1] sm:$0xff]
    %1308 = vset.pattern.permute.xlu0 0
    %1309 = vperm.xlu0 %1308, %v1306
    %v1310 = vpop.permute.xlu0 %1309
    %v1312 = vmul.f32 %v1310, %v1285
    %1314 = vrot.lane.b32.xlu0 %v1302, 6
    %v1315 = vpop.permute.xlu0 %1314
    %v1317 = vmul.f32 %v1312, %v1315
    %1319 = vrot.lane.b32.xlu0 %v1317, 122
    %v1320 = vpop.permute.xlu0 %1319
    %v1322 = vsel %vm823, %v1320, 0.0
    %1323 = vadd.xlane.f32.xlu0 %v1322
    %v1324 = vpop.xlane.xlu0 %1323
    %v1325 = vrot.slane %v1324, 4
    %v1326 = vadd.f32 %v1324, %v1325
    %v1327 = vrot.slane %v1326, 2
    %v1328 = vadd.f32 %v1326, %v1327
    %v1329 = vrot.slane %v1328, 1
    %v1330 = vadd.f32 %v1328, %v1329
    %1332 = vrot.lane.b32.xlu0 %v1303, 6
    %v1333 = vpop.permute.xlu0 %1332
    %v1335 = vmul.f32 %v1312, %v1333
    %1337 = vrot.lane.b32.xlu0 %v1335, 122
    %v1338 = vpop.permute.xlu0 %1337
    %v1340 = vsel %vm823, %v1338, 0.0
    %1341 = vadd.xlane.f32.xlu0 %v1340
    %v1342 = vpop.xlane.xlu0 %1341
    %v1343 = vrot.slane %v1342, 4
    %v1344 = vadd.f32 %v1342, %v1343
    %v1345 = vrot.slane %v1344, 2
    %v1346 = vadd.f32 %v1344, %v1345
    %v1347 = vrot.slane %v1346, 1
    %v1348 = vadd.f32 %v1346, %v1347
    %v1349 = vmul.f32 %v1330, %v1302
    %v1350 = vmul.f32 %v1348, %v1303
    %v1351 = vadd.f32 %v1349, %v1350
    %v1352 = vmul.f32 %v1351, 0.00390625
    %s1353 = sld [smem:[#allocation8 + $0x1f]]
    %v1354 = vstv %s1353
    %v1355 = vadd.f32 %v1352, %v1354
    %v1356 = vmax.f32 %v1355, 0.0
    %s1357 = scalar_lea.vmem %s1, 8
    %v1358 = vld [vmem:[%s1357] sm:$0xff]
    %1360 = vset.pattern.permute.xlu0 0
    %1361 = vperm.xlu0 %1360, %v1358
    %v1362 = vpop.permute.xlu0 %1361
    %v1364 = vmul.f32 %v1362, %v1356
    %1366 = vset.pattern.permute.xlu0 0
    %1367 = vperm.xlu0 %1366, %v1305
    %v1368 = vpop.permute.xlu0 %1367
    %v1370 = vadd.f32 %v1368, %v1364
    %v1371 = vxor.u32 %v1370, 2147483648
    %v1372 = vmul.f32 %v1371, 1.442695
    %v1373 = vpow.pop %v1372
    %v1374 = vadd.f32 %v1373, 1.0
    %v1375 = vrcp.pop %v1374
    %v1376 = vmul.f32 1.0, %v1375
    loop: start=0, step=1, limit=7
    $region33: #{tpu_custom_call.1} parent=1 // loop_pre_header
      _
    $region34: #{tpu_custom_call.1} parent=1 // loop_header
      %s1378 = sphi 0, %s1382
      %p1379 = scmp.ge.s32.totalorder %s1378, 7
      %v1383 = vphi 0.0, %v2072
      %v1384 = vphi 0.0, %v2073
      %v1385 = vphi 0.0, %v2074
      %v1386 = vphi 0.0, %v2075
      %v1387 = vphi 0.0, %v2076
      %v1388 = vphi 0.0, %v2077
      %v1389 = vphi 0.0, %v2078
      %v1390 = vphi 0.0, %v2079
      %v1391 = vphi 0.0, %v2080
      %v1392 = vphi 0.0, %v2081
      %v1393 = vphi 0.0, %v2082
      %v1394 = vphi 0.0, %v2083
      %v1395 = vphi 0.0, %v2084
      %v1396 = vphi 0.0, %v2085
      %v1397 = vphi 0.0, %v2086
      %v1398 = vphi 0.0, %v2087
    $region35: #{tpu_custom_call.1} parent=1 // loop_header_branch
      %1381 = sbr.rel (%p1379) target = $region39
    $region36: #{tpu_custom_call.1} parent=1 // loop_body
      %s1399 = smul.u32 %s1378, 7
      %s1400 = smul.u32 %s1399, 2
      %s1401 = scalar_lea.vmem %s2, %s1400
      %v1402 = vld [vmem:[%s1401] sm:$0x3]
      %s1403 = smul.u32 %s1378, 2
      %s1404 = scalar_lea.vmem [#allocation3], %s1403
      %v1405 = vld [vmem:[%s1404] sm:$0x3]
      %v1406 = vld [vmem:[%s1404 + $0x2] sm:$0x3]
      %v1407 = vld [vmem:[%s1404 + $0x4] sm:$0x3]
      %v1408 = vld [vmem:[%s1404 + $0x6] sm:$0x3]
      %v1409 = vld [vmem:[%s1404 + $0x8] sm:$0x3]
      %v1410 = vld [vmem:[%s1404 + $0xa] sm:$0x3]
      %v1411 = vld [vmem:[%s1404 + $0xc] sm:$0x3]
      %v1412 = vld [vmem:[%s1404 + $0xe] sm:$0x3]
      %v1413 = vld [vmem:[%s1404 + $0x10] sm:$0x3]
      %v1414 = vld [vmem:[%s1404 + $0x12] sm:$0x3]
      %v1415 = vld [vmem:[%s1404 + $0x14] sm:$0x3]
      %v1416 = vld [vmem:[%s1404 + $0x16] sm:$0x3]
      %v1417 = vld [vmem:[%s1404 + $0x18] sm:$0x3]
      %v1418 = vld [vmem:[%s1404 + $0x1a] sm:$0x3]
      %v1419 = vld [vmem:[%s1404 + $0x1c] sm:$0x3]
      %v1420 = vld [vmem:[%s1404 + $0x1e] sm:$0x3]
      %1422 = vset.pattern.permute.xlu0 0
      %1423 = vperm.xlu0 %1422, %v1402
      %v1424 = vpop.permute.xlu0 %1423
      %v1426 = vmul.f32 %v1424, %v1405
      %v1427 = vmul.f32 %v1424, %v1406
      %v1428 = vmul.f32 %v1424, %v1407
      %v1429 = vmul.f32 %v1424, %v1408
      %v1430 = vmul.f32 %v1424, %v1409
      %v1431 = vmul.f32 %v1424, %v1410
      %v1432 = vmul.f32 %v1424, %v1411
      %v1433 = vmul.f32 %v1424, %v1412
      %v1434 = vmul.f32 %v1424, %v1413
      %v1435 = vmul.f32 %v1424, %v1414
      %v1436 = vmul.f32 %v1424, %v1415
      %v1437 = vmul.f32 %v1424, %v1416
      %v1438 = vmul.f32 %v1424, %v1417
      %v1439 = vmul.f32 %v1424, %v1418
      %v1440 = vmul.f32 %v1424, %v1419
      %v1441 = vmul.f32 %v1424, %v1420
      %v1442 = vadd.f32 %v1383, %v1426
      %v1443 = vadd.f32 %v1384, %v1427
      %v1444 = vadd.f32 %v1385, %v1428
      %v1445 = vadd.f32 %v1386, %v1429
      %v1446 = vadd.f32 %v1387, %v1430
      %v1447 = vadd.f32 %v1388, %v1431
      %v1448 = vadd.f32 %v1389, %v1432
      %v1449 = vadd.f32 %v1390, %v1433
      %v1450 = vadd.f32 %v1391, %v1434
      %v1451 = vadd.f32 %v1392, %v1435
      %v1452 = vadd.f32 %v1393, %v1436
      %v1453 = vadd.f32 %v1394, %v1437
      %v1454 = vadd.f32 %v1395, %v1438
      %v1455 = vadd.f32 %v1396, %v1439
      %v1456 = vadd.f32 %v1397, %v1440
      %v1457 = vadd.f32 %v1398, %v1441
      %s1458 = sadd.s32 %s1399, 1
      %s1459 = smul.u32 %s1458, 2
      %s1460 = scalar_lea.vmem %s2, %s1459
      %v1461 = vld [vmem:[%s1460] sm:$0x3]
      %1463 = vset.pattern.permute.xlu0 0
      %1464 = vperm.xlu0 %1463, %v1461
      %v1465 = vpop.permute.xlu0 %1464
      %v1467 = vmul.f32 %v1465, %v1405
      %v1468 = vmul.f32 %v1465, %v1406
      %v1469 = vmul.f32 %v1465, %v1407
      %v1470 = vmul.f32 %v1465, %v1408
      %v1471 = vmul.f32 %v1465, %v1409
      %v1472 = vmul.f32 %v1465, %v1410
      %v1473 = vmul.f32 %v1465, %v1411
      %v1474 = vmul.f32 %v1465, %v1412
      %v1475 = vmul.f32 %v1465, %v1413
      %v1476 = vmul.f32 %v1465, %v1414
      %v1477 = vmul.f32 %v1465, %v1415
      %v1478 = vmul.f32 %v1465, %v1416
      %v1479 = vmul.f32 %v1465, %v1417
      %v1480 = vmul.f32 %v1465, %v1418
      %v1481 = vmul.f32 %v1465, %v1419
      %v1482 = vmul.f32 %v1465, %v1420
      %1499 = vrot.lane.b32.xlu0 %v1467, 126
      %v1500 = vpop.permute.xlu0 %1499
      %1501 = vrot.lane.b32.xlu0 %v1468, 126
      %v1502 = vpop.permute.xlu0 %1501
      %1503 = vrot.lane.b32.xlu0 %v1469, 126
      %v1504 = vpop.permute.xlu0 %1503
      %1505 = vrot.lane.b32.xlu0 %v1470, 126
      %v1506 = vpop.permute.xlu0 %1505
      %1507 = vrot.lane.b32.xlu0 %v1471, 126
      %v1508 = vpop.permute.xlu0 %1507
      %1509 = vrot.lane.b32.xlu0 %v1472, 126
      %v1510 = vpop.permute.xlu0 %1509
      %1511 = vrot.lane.b32.xlu0 %v1473, 126
      %v1512 = vpop.permute.xlu0 %1511
      %1513 = vrot.lane.b32.xlu0 %v1474, 126
      %v1514 = vpop.permute.xlu0 %1513
      %1515 = vrot.lane.b32.xlu0 %v1475, 126
      %v1516 = vpop.permute.xlu0 %1515
      %1517 = vrot.lane.b32.xlu0 %v1476, 126
      %v1518 = vpop.permute.xlu0 %1517
      %1519 = vrot.lane.b32.xlu0 %v1477, 126
      %v1520 = vpop.permute.xlu0 %1519
      %1521 = vrot.lane.b32.xlu0 %v1478, 126
      %v1522 = vpop.permute.xlu0 %1521
      %1523 = vrot.lane.b32.xlu0 %v1479, 126
      %v1524 = vpop.permute.xlu0 %1523
      %1525 = vrot.lane.b32.xlu0 %v1480, 126
      %v1526 = vpop.permute.xlu0 %1525
      %1527 = vrot.lane.b32.xlu0 %v1481, 126
      %v1528 = vpop.permute.xlu0 %1527
      %1529 = vrot.lane.b32.xlu0 %v1482, 126
      %v1530 = vpop.permute.xlu0 %1529
      %v1547 = vadd.f32 %v1442, %v1500
      %v1548 = vadd.f32 %v1443, %v1502
      %v1549 = vadd.f32 %v1444, %v1504
      %v1550 = vadd.f32 %v1445, %v1506
      %v1551 = vadd.f32 %v1446, %v1508
      %v1552 = vadd.f32 %v1447, %v1510
      %v1553 = vadd.f32 %v1448, %v1512
      %v1554 = vadd.f32 %v1449, %v1514
      %v1555 = vadd.f32 %v1450, %v1516
      %v1556 = vadd.f32 %v1451, %v1518
      %v1557 = vadd.f32 %v1452, %v1520
      %v1558 = vadd.f32 %v1453, %v1522
      %v1559 = vadd.f32 %v1454, %v1524
      %v1560 = vadd.f32 %v1455, %v1526
      %v1561 = vadd.f32 %v1456, %v1528
      %v1562 = vadd.f32 %v1457, %v1530
      %s1563 = sadd.s32 %s1399, 2
      %s1564 = smul.u32 %s1563, 2
      %s1565 = scalar_lea.vmem %s2, %s1564
      %v1566 = vld [vmem:[%s1565] sm:$0x3]
      %1568 = vset.pattern.permute.xlu0 0
      %1569 = vperm.xlu0 %1568, %v1566
      %v1570 = vpop.permute.xlu0 %1569
      %v1572 = vmul.f32 %v1570, %v1405
      %v1573 = vmul.f32 %v1570, %v1406
      %v1574 = vmul.f32 %v1570, %v1407
      %v1575 = vmul.f32 %v1570, %v1408
      %v1576 = vmul.f32 %v1570, %v1409
      %v1577 = vmul.f32 %v1570, %v1410
      %v1578 = vmul.f32 %v1570, %v1411
      %v1579 = vmul.f32 %v1570, %v1412
      %v1580 = vmul.f32 %v1570, %v1413
      %v1581 = vmul.f32 %v1570, %v1414
      %v1582 = vmul.f32 %v1570, %v1415
      %v1583 = vmul.f32 %v1570, %v1416
      %v1584 = vmul.f32 %v1570, %v1417
      %v1585 = vmul.f32 %v1570, %v1418
      %v1586 = vmul.f32 %v1570, %v1419
      %v1587 = vmul.f32 %v1570, %v1420
      %1604 = vrot.lane.b32.xlu0 %v1572, 124
      %v1605 = vpop.permute.xlu0 %1604
      %1606 = vrot.lane.b32.xlu0 %v1573, 124
      %v1607 = vpop.permute.xlu0 %1606
      %1608 = vrot.lane.b32.xlu0 %v1574, 124
      %v1609 = vpop.permute.xlu0 %1608
      %1610 = vrot.lane.b32.xlu0 %v1575, 124
      %v1611 = vpop.permute.xlu0 %1610
      %1612 = vrot.lane.b32.xlu0 %v1576, 124
      %v1613 = vpop.permute.xlu0 %1612
      %1614 = vrot.lane.b32.xlu0 %v1577, 124
      %v1615 = vpop.permute.xlu0 %1614
      %1616 = vrot.lane.b32.xlu0 %v1578, 124
      %v1617 = vpop.permute.xlu0 %1616
      %1618 = vrot.lane.b32.xlu0 %v1579, 124
      %v1619 = vpop.permute.xlu0 %1618
      %1620 = vrot.lane.b32.xlu0 %v1580, 124
      %v1621 = vpop.permute.xlu0 %1620
      %1622 = vrot.lane.b32.xlu0 %v1581, 124
      %v1623 = vpop.permute.xlu0 %1622
      %1624 = vrot.lane.b32.xlu0 %v1582, 124
      %v1625 = vpop.permute.xlu0 %1624
      %1626 = vrot.lane.b32.xlu0 %v1583, 124
      %v1627 = vpop.permute.xlu0 %1626
      %1628 = vrot.lane.b32.xlu0 %v1584, 124
      %v1629 = vpop.permute.xlu0 %1628
      %1630 = vrot.lane.b32.xlu0 %v1585, 124
      %v1631 = vpop.permute.xlu0 %1630
      %1632 = vrot.lane.b32.xlu0 %v1586, 124
      %v1633 = vpop.permute.xlu0 %1632
      %1634 = vrot.lane.b32.xlu0 %v1587, 124
      %v1635 = vpop.permute.xlu0 %1634
      %v1652 = vadd.f32 %v1547, %v1605
      %v1653 = vadd.f32 %v1548, %v1607
      %v1654 = vadd.f32 %v1549, %v1609
      %v1655 = vadd.f32 %v1550, %v1611
      %v1656 = vadd.f32 %v1551, %v1613
      %v1657 = vadd.f32 %v1552, %v1615
      %v1658 = vadd.f32 %v1553, %v1617
      %v1659 = vadd.f32 %v1554, %v1619
      %v1660 = vadd.f32 %v1555, %v1621
      %v1661 = vadd.f32 %v1556, %v1623
      %v1662 = vadd.f32 %v1557, %v1625
      %v1663 = vadd.f32 %v1558, %v1627
      %v1664 = vadd.f32 %v1559, %v1629
      %v1665 = vadd.f32 %v1560, %v1631
      %v1666 = vadd.f32 %v1561, %v1633
      %v1667 = vadd.f32 %v1562, %v1635
      %s1668 = sadd.s32 %s1399, 3
      %s1669 = smul.u32 %s1668, 2
      %s1670 = scalar_lea.vmem %s2, %s1669
      %v1671 = vld [vmem:[%s1670] sm:$0x3]
      %1673 = vset.pattern.permute.xlu0 0
      %1674 = vperm.xlu0 %1673, %v1671
      %v1675 = vpop.permute.xlu0 %1674
      %v1677 = vmul.f32 %v1675, %v1405
      %v1678 = vmul.f32 %v1675, %v1406
      %v1679 = vmul.f32 %v1675, %v1407
      %v1680 = vmul.f32 %v1675, %v1408
      %v1681 = vmul.f32 %v1675, %v1409
      %v1682 = vmul.f32 %v1675, %v1410
      %v1683 = vmul.f32 %v1675, %v1411
      %v1684 = vmul.f32 %v1675, %v1412
      %v1685 = vmul.f32 %v1675, %v1413
      %v1686 = vmul.f32 %v1675, %v1414
      %v1687 = vmul.f32 %v1675, %v1415
      %v1688 = vmul.f32 %v1675, %v1416
      %v1689 = vmul.f32 %v1675, %v1417
      %v1690 = vmul.f32 %v1675, %v1418
      %v1691 = vmul.f32 %v1675, %v1419
      %v1692 = vmul.f32 %v1675, %v1420
      %1709 = vrot.lane.b32.xlu0 %v1677, 122
      %v1710 = vpop.permute.xlu0 %1709
      %1711 = vrot.lane.b32.xlu0 %v1678, 122
      %v1712 = vpop.permute.xlu0 %1711
      %1713 = vrot.lane.b32.xlu0 %v1679, 122
      %v1714 = vpop.permute.xlu0 %1713
      %1715 = vrot.lane.b32.xlu0 %v1680, 122
      %v1716 = vpop.permute.xlu0 %1715
      %1717 = vrot.lane.b32.xlu0 %v1681, 122
      %v1718 = vpop.permute.xlu0 %1717
      %1719 = vrot.lane.b32.xlu0 %v1682, 122
      %v1720 = vpop.permute.xlu0 %1719
      %1721 = vrot.lane.b32.xlu0 %v1683, 122
      %v1722 = vpop.permute.xlu0 %1721
      %1723 = vrot.lane.b32.xlu0 %v1684, 122
      %v1724 = vpop.permute.xlu0 %1723
      %1725 = vrot.lane.b32.xlu0 %v1685, 122
      %v1726 = vpop.permute.xlu0 %1725
      %1727 = vrot.lane.b32.xlu0 %v1686, 122
      %v1728 = vpop.permute.xlu0 %1727
      %1729 = vrot.lane.b32.xlu0 %v1687, 122
      %v1730 = vpop.permute.xlu0 %1729
      %1731 = vrot.lane.b32.xlu0 %v1688, 122
      %v1732 = vpop.permute.xlu0 %1731
      %1733 = vrot.lane.b32.xlu0 %v1689, 122
      %v1734 = vpop.permute.xlu0 %1733
      %1735 = vrot.lane.b32.xlu0 %v1690, 122
      %v1736 = vpop.permute.xlu0 %1735
      %1737 = vrot.lane.b32.xlu0 %v1691, 122
      %v1738 = vpop.permute.xlu0 %1737
      %1739 = vrot.lane.b32.xlu0 %v1692, 122
      %v1740 = vpop.permute.xlu0 %1739
      %v1757 = vadd.f32 %v1652, %v1710
      %v1758 = vadd.f32 %v1653, %v1712
      %v1759 = vadd.f32 %v1654, %v1714
      %v1760 = vadd.f32 %v1655, %v1716
      %v1761 = vadd.f32 %v1656, %v1718
      %v1762 = vadd.f32 %v1657, %v1720
      %v1763 = vadd.f32 %v1658, %v1722
      %v1764 = vadd.f32 %v1659, %v1724
      %v1765 = vadd.f32 %v1660, %v1726
      %v1766 = vadd.f32 %v1661, %v1728
      %v1767 = vadd.f32 %v1662, %v1730
      %v1768 = vadd.f32 %v1663, %v1732
      %v1769 = vadd.f32 %v1664, %v1734
      %v1770 = vadd.f32 %v1665, %v1736
      %v1771 = vadd.f32 %v1666, %v1738
      %v1772 = vadd.f32 %v1667, %v1740
      %s1773 = sadd.s32 %s1399, 4
      %s1774 = smul.u32 %s1773, 2
      %s1775 = scalar_lea.vmem %s2, %s1774
      %v1776 = vld [vmem:[%s1775] sm:$0x3]
      %1778 = vset.pattern.permute.xlu0 0
      %1779 = vperm.xlu0 %1778, %v1776
      %v1780 = vpop.permute.xlu0 %1779
      %v1782 = vmul.f32 %v1780, %v1405
      %v1783 = vmul.f32 %v1780, %v1406
      %v1784 = vmul.f32 %v1780, %v1407
      %v1785 = vmul.f32 %v1780, %v1408
      %v1786 = vmul.f32 %v1780, %v1409
      %v1787 = vmul.f32 %v1780, %v1410
      %v1788 = vmul.f32 %v1780, %v1411
      %v1789 = vmul.f32 %v1780, %v1412
      %v1790 = vmul.f32 %v1780, %v1413
      %v1791 = vmul.f32 %v1780, %v1414
      %v1792 = vmul.f32 %v1780, %v1415
      %v1793 = vmul.f32 %v1780, %v1416
      %v1794 = vmul.f32 %v1780, %v1417
      %v1795 = vmul.f32 %v1780, %v1418
      %v1796 = vmul.f32 %v1780, %v1419
      %v1797 = vmul.f32 %v1780, %v1420
      %1814 = vrot.lane.b32.xlu0 %v1782, 120
      %v1815 = vpop.permute.xlu0 %1814
      %1816 = vrot.lane.b32.xlu0 %v1783, 120
      %v1817 = vpop.permute.xlu0 %1816
      %1818 = vrot.lane.b32.xlu0 %v1784, 120
      %v1819 = vpop.permute.xlu0 %1818
      %1820 = vrot.lane.b32.xlu0 %v1785, 120
      %v1821 = vpop.permute.xlu0 %1820
      %1822 = vrot.lane.b32.xlu0 %v1786, 120
      %v1823 = vpop.permute.xlu0 %1822
      %1824 = vrot.lane.b32.xlu0 %v1787, 120
      %v1825 = vpop.permute.xlu0 %1824
      %1826 = vrot.lane.b32.xlu0 %v1788, 120
      %v1827 = vpop.permute.xlu0 %1826
      %1828 = vrot.lane.b32.xlu0 %v1789, 120
      %v1829 = vpop.permute.xlu0 %1828
      %1830 = vrot.lane.b32.xlu0 %v1790, 120
      %v1831 = vpop.permute.xlu0 %1830
      %1832 = vrot.lane.b32.xlu0 %v1791, 120
      %v1833 = vpop.permute.xlu0 %1832
      %1834 = vrot.lane.b32.xlu0 %v1792, 120
      %v1835 = vpop.permute.xlu0 %1834
      %1836 = vrot.lane.b32.xlu0 %v1793, 120
      %v1837 = vpop.permute.xlu0 %1836
      %1838 = vrot.lane.b32.xlu0 %v1794, 120
      %v1839 = vpop.permute.xlu0 %1838
      %1840 = vrot.lane.b32.xlu0 %v1795, 120
      %v1841 = vpop.permute.xlu0 %1840
      %1842 = vrot.lane.b32.xlu0 %v1796, 120
      %v1843 = vpop.permute.xlu0 %1842
      %1844 = vrot.lane.b32.xlu0 %v1797, 120
      %v1845 = vpop.permute.xlu0 %1844
      %v1862 = vadd.f32 %v1757, %v1815
      %v1863 = vadd.f32 %v1758, %v1817
      %v1864 = vadd.f32 %v1759, %v1819
      %v1865 = vadd.f32 %v1760, %v1821
      %v1866 = vadd.f32 %v1761, %v1823
      %v1867 = vadd.f32 %v1762, %v1825
      %v1868 = vadd.f32 %v1763, %v1827
      %v1869 = vadd.f32 %v1764, %v1829
      %v1870 = vadd.f32 %v1765, %v1831
      %v1871 = vadd.f32 %v1766, %v1833
      %v1872 = vadd.f32 %v1767, %v1835
      %v1873 = vadd.f32 %v1768, %v1837
      %v1874 = vadd.f32 %v1769, %v1839
      %v1875 = vadd.f32 %v1770, %v1841
      %v1876 = vadd.f32 %v1771, %v1843
      %v1877 = vadd.f32 %v1772, %v1845
      %s1878 = sadd.s32 %s1399, 5
      %s1879 = smul.u32 %s1878, 2
      %s1880 = scalar_lea.vmem %s2, %s1879
      %v1881 = vld [vmem:[%s1880] sm:$0x3]
      %1883 = vset.pattern.permute.xlu0 0
      %1884 = vperm.xlu0 %1883, %v1881
      %v1885 = vpop.permute.xlu0 %1884
      %v1887 = vmul.f32 %v1885, %v1405
      %v1888 = vmul.f32 %v1885, %v1406
      %v1889 = vmul.f32 %v1885, %v1407
      %v1890 = vmul.f32 %v1885, %v1408
      %v1891 = vmul.f32 %v1885, %v1409
      %v1892 = vmul.f32 %v1885, %v1410
      %v1893 = vmul.f32 %v1885, %v1411
      %v1894 = vmul.f32 %v1885, %v1412
      %v1895 = vmul.f32 %v1885, %v1413
      %v1896 = vmul.f32 %v1885, %v1414
      %v1897 = vmul.f32 %v1885, %v1415
      %v1898 = vmul.f32 %v1885, %v1416
      %v1899 = vmul.f32 %v1885, %v1417
      %v1900 = vmul.f32 %v1885, %v1418
      %v1901 = vmul.f32 %v1885, %v1419
      %v1902 = vmul.f32 %v1885, %v1420
      %1919 = vrot.lane.b32.xlu0 %v1887, 118
      %v1920 = vpop.permute.xlu0 %1919
      %1921 = vrot.lane.b32.xlu0 %v1888, 118
      %v1922 = vpop.permute.xlu0 %1921
      %1923 = vrot.lane.b32.xlu0 %v1889, 118
      %v1924 = vpop.permute.xlu0 %1923
      %1925 = vrot.lane.b32.xlu0 %v1890, 118
      %v1926 = vpop.permute.xlu0 %1925
      %1927 = vrot.lane.b32.xlu0 %v1891, 118
      %v1928 = vpop.permute.xlu0 %1927
      %1929 = vrot.lane.b32.xlu0 %v1892, 118
      %v1930 = vpop.permute.xlu0 %1929
      %1931 = vrot.lane.b32.xlu0 %v1893, 118
      %v1932 = vpop.permute.xlu0 %1931
      %1933 = vrot.lane.b32.xlu0 %v1894, 118
      %v1934 = vpop.permute.xlu0 %1933
      %1935 = vrot.lane.b32.xlu0 %v1895, 118
      %v1936 = vpop.permute.xlu0 %1935
      %1937 = vrot.lane.b32.xlu0 %v1896, 118
      %v1938 = vpop.permute.xlu0 %1937
      %1939 = vrot.lane.b32.xlu0 %v1897, 118
      %v1940 = vpop.permute.xlu0 %1939
      %1941 = vrot.lane.b32.xlu0 %v1898, 118
      %v1942 = vpop.permute.xlu0 %1941
      %1943 = vrot.lane.b32.xlu0 %v1899, 118
      %v1944 = vpop.permute.xlu0 %1943
      %1945 = vrot.lane.b32.xlu0 %v1900, 118
      %v1946 = vpop.permute.xlu0 %1945
      %1947 = vrot.lane.b32.xlu0 %v1901, 118
      %v1948 = vpop.permute.xlu0 %1947
      %1949 = vrot.lane.b32.xlu0 %v1902, 118
      %v1950 = vpop.permute.xlu0 %1949
      %v1967 = vadd.f32 %v1862, %v1920
      %v1968 = vadd.f32 %v1863, %v1922
      %v1969 = vadd.f32 %v1864, %v1924
      %v1970 = vadd.f32 %v1865, %v1926
      %v1971 = vadd.f32 %v1866, %v1928
      %v1972 = vadd.f32 %v1867, %v1930
      %v1973 = vadd.f32 %v1868, %v1932
      %v1974 = vadd.f32 %v1869, %v1934
      %v1975 = vadd.f32 %v1870, %v1936
      %v1976 = vadd.f32 %v1871, %v1938
      %v1977 = vadd.f32 %v1872, %v1940
      %v1978 = vadd.f32 %v1873, %v1942
      %v1979 = vadd.f32 %v1874, %v1944
      %v1980 = vadd.f32 %v1875, %v1946
      %v1981 = vadd.f32 %v1876, %v1948
      %v1982 = vadd.f32 %v1877, %v1950
      %s1983 = sadd.s32 %s1399, 6
      %s1984 = smul.u32 %s1983, 2
      %s1985 = scalar_lea.vmem %s2, %s1984
      %v1986 = vld [vmem:[%s1985] sm:$0x3]
      %1988 = vset.pattern.permute.xlu0 0
      %1989 = vperm.xlu0 %1988, %v1986
      %v1990 = vpop.permute.xlu0 %1989
      %v1992 = vmul.f32 %v1990, %v1405
      %v1993 = vmul.f32 %v1990, %v1406
      %v1994 = vmul.f32 %v1990, %v1407
      %v1995 = vmul.f32 %v1990, %v1408
      %v1996 = vmul.f32 %v1990, %v1409
      %v1997 = vmul.f32 %v1990, %v1410
      %v1998 = vmul.f32 %v1990, %v1411
      %v1999 = vmul.f32 %v1990, %v1412
      %v2000 = vmul.f32 %v1990, %v1413
      %v2001 = vmul.f32 %v1990, %v1414
      %v2002 = vmul.f32 %v1990, %v1415
      %v2003 = vmul.f32 %v1990, %v1416
      %v2004 = vmul.f32 %v1990, %v1417
      %v2005 = vmul.f32 %v1990, %v1418
      %v2006 = vmul.f32 %v1990, %v1419
      %v2007 = vmul.f32 %v1990, %v1420
      %2024 = vrot.lane.b32.xlu0 %v1992, 116
      %v2025 = vpop.permute.xlu0 %2024
      %2026 = vrot.lane.b32.xlu0 %v1993, 116
      %v2027 = vpop.permute.xlu0 %2026
      %2028 = vrot.lane.b32.xlu0 %v1994, 116
      %v2029 = vpop.permute.xlu0 %2028
      %2030 = vrot.lane.b32.xlu0 %v1995, 116
      %v2031 = vpop.permute.xlu0 %2030
      %2032 = vrot.lane.b32.xlu0 %v1996, 116
      %v2033 = vpop.permute.xlu0 %2032
      %2034 = vrot.lane.b32.xlu0 %v1997, 116
      %v2035 = vpop.permute.xlu0 %2034
      %2036 = vrot.lane.b32.xlu0 %v1998, 116
      %v2037 = vpop.permute.xlu0 %2036
      %2038 = vrot.lane.b32.xlu0 %v1999, 116
      %v2039 = vpop.permute.xlu0 %2038
      %2040 = vrot.lane.b32.xlu0 %v2000, 116
      %v2041 = vpop.permute.xlu0 %2040
      %2042 = vrot.lane.b32.xlu0 %v2001, 116
      %v2043 = vpop.permute.xlu0 %2042
      %2044 = vrot.lane.b32.xlu0 %v2002, 116
      %v2045 = vpop.permute.xlu0 %2044
      %2046 = vrot.lane.b32.xlu0 %v2003, 116
      %v2047 = vpop.permute.xlu0 %2046
      %2048 = vrot.lane.b32.xlu0 %v2004, 116
      %v2049 = vpop.permute.xlu0 %2048
      %2050 = vrot.lane.b32.xlu0 %v2005, 116
      %v2051 = vpop.permute.xlu0 %2050
      %2052 = vrot.lane.b32.xlu0 %v2006, 116
      %v2053 = vpop.permute.xlu0 %2052
      %2054 = vrot.lane.b32.xlu0 %v2007, 116
      %v2055 = vpop.permute.xlu0 %2054
      %v2072 = vadd.f32 %v1967, %v2025
      %v2073 = vadd.f32 %v1968, %v2027
      %v2074 = vadd.f32 %v1969, %v2029
      %v2075 = vadd.f32 %v1970, %v2031
      %v2076 = vadd.f32 %v1971, %v2033
      %v2077 = vadd.f32 %v1972, %v2035
      %v2078 = vadd.f32 %v1973, %v2037
      %v2079 = vadd.f32 %v1974, %v2039
      %v2080 = vadd.f32 %v1975, %v2041
      %v2081 = vadd.f32 %v1976, %v2043
      %v2082 = vadd.f32 %v1977, %v2045
      %v2083 = vadd.f32 %v1978, %v2047
      %v2084 = vadd.f32 %v1979, %v2049
      %v2085 = vadd.f32 %v1980, %v2051
      %v2086 = vadd.f32 %v1981, %v2053
      %v2087 = vadd.f32 %v1982, %v2055
    $region37: #{tpu_custom_call.1} parent=1 // loop_footer
      %s1382 = sadd.s32 1, %s1378
    $region38: #{tpu_custom_call.1} parent=1 // loop_footer_branch
      %1377 = sbr.rel target = $region34
    $region39: #{tpu_custom_call.1} parent=1 // loop_exit
      _
    %vm2088 = vcmask 254976
    %v2089 = vsel %vm2088, %v1383, 0.0
    %v2090 = vrot.slane %v2089, 4
    %v2091 = vadd.f32 %v2089, %v2090
    %v2092 = vrot.slane %v2091, 2
    %v2093 = vadd.f32 %v2091, %v2092
    %v2094 = vrot.slane %v2093, 1
    %v2095 = vadd.f32 %v2093, %v2094
    %v2096 = vsel %vm2088, %v1384, 0.0
    %v2097 = vrot.slane %v2096, 4
    %v2098 = vadd.f32 %v2096, %v2097
    %v2099 = vrot.slane %v2098, 2
    %v2100 = vadd.f32 %v2098, %v2099
    %v2101 = vrot.slane %v2100, 1
    %v2102 = vadd.f32 %v2100, %v2101
    %v2103 = vsel %vm2088, %v1385, 0.0
    %v2104 = vrot.slane %v2103, 4
    %v2105 = vadd.f32 %v2103, %v2104
    %v2106 = vrot.slane %v2105, 2
    %v2107 = vadd.f32 %v2105, %v2106
    %v2108 = vrot.slane %v2107, 1
    %v2109 = vadd.f32 %v2107, %v2108
    %v2110 = vsel %vm2088, %v1386, 0.0
    %v2111 = vrot.slane %v2110, 4
    %v2112 = vadd.f32 %v2110, %v2111
    %v2113 = vrot.slane %v2112, 2
    %v2114 = vadd.f32 %v2112, %v2113
    %v2115 = vrot.slane %v2114, 1
    %v2116 = vadd.f32 %v2114, %v2115
    %v2117 = vsel %vm2088, %v1387, 0.0
    %v2118 = vrot.slane %v2117, 4
    %v2119 = vadd.f32 %v2117, %v2118
    %v2120 = vrot.slane %v2119, 2
    %v2121 = vadd.f32 %v2119, %v2120
    %v2122 = vrot.slane %v2121, 1
    %v2123 = vadd.f32 %v2121, %v2122
    %v2124 = vsel %vm2088, %v1388, 0.0
    %v2125 = vrot.slane %v2124, 4
    %v2126 = vadd.f32 %v2124, %v2125
    %v2127 = vrot.slane %v2126, 2
    %v2128 = vadd.f32 %v2126, %v2127
    %v2129 = vrot.slane %v2128, 1
    %v2130 = vadd.f32 %v2128, %v2129
    %v2131 = vsel %vm2088, %v1389, 0.0
    %v2132 = vrot.slane %v2131, 4
    %v2133 = vadd.f32 %v2131, %v2132
    %v2134 = vrot.slane %v2133, 2
    %v2135 = vadd.f32 %v2133, %v2134
    %v2136 = vrot.slane %v2135, 1
    %v2137 = vadd.f32 %v2135, %v2136
    %v2138 = vsel %vm2088, %v1390, 0.0
    %v2139 = vrot.slane %v2138, 4
    %v2140 = vadd.f32 %v2138, %v2139
    %v2141 = vrot.slane %v2140, 2
    %v2142 = vadd.f32 %v2140, %v2141
    %v2143 = vrot.slane %v2142, 1
    %v2144 = vadd.f32 %v2142, %v2143
    %v2145 = vsel %vm2088, %v1391, 0.0
    %v2146 = vrot.slane %v2145, 4
    %v2147 = vadd.f32 %v2145, %v2146
    %v2148 = vrot.slane %v2147, 2
    %v2149 = vadd.f32 %v2147, %v2148
    %v2150 = vrot.slane %v2149, 1
    %v2151 = vadd.f32 %v2149, %v2150
    %v2152 = vsel %vm2088, %v1392, 0.0
    %v2153 = vrot.slane %v2152, 4
    %v2154 = vadd.f32 %v2152, %v2153
    %v2155 = vrot.slane %v2154, 2
    %v2156 = vadd.f32 %v2154, %v2155
    %v2157 = vrot.slane %v2156, 1
    %v2158 = vadd.f32 %v2156, %v2157
    %v2159 = vsel %vm2088, %v1393, 0.0
    %v2160 = vrot.slane %v2159, 4
    %v2161 = vadd.f32 %v2159, %v2160
    %v2162 = vrot.slane %v2161, 2
    %v2163 = vadd.f32 %v2161, %v2162
    %v2164 = vrot.slane %v2163, 1
    %v2165 = vadd.f32 %v2163, %v2164
    %v2166 = vsel %vm2088, %v1394, 0.0
    %v2167 = vrot.slane %v2166, 4
    %v2168 = vadd.f32 %v2166, %v2167
    %v2169 = vrot.slane %v2168, 2
    %v2170 = vadd.f32 %v2168, %v2169
    %v2171 = vrot.slane %v2170, 1
    %v2172 = vadd.f32 %v2170, %v2171
    %v2173 = vsel %vm2088, %v1395, 0.0
    %v2174 = vrot.slane %v2173, 4
    %v2175 = vadd.f32 %v2173, %v2174
    %v2176 = vrot.slane %v2175, 2
    %v2177 = vadd.f32 %v2175, %v2176
    %v2178 = vrot.slane %v2177, 1
    %v2179 = vadd.f32 %v2177, %v2178
    %v2180 = vsel %vm2088, %v1396, 0.0
    %v2181 = vrot.slane %v2180, 4
    %v2182 = vadd.f32 %v2180, %v2181
    %v2183 = vrot.slane %v2182, 2
    %v2184 = vadd.f32 %v2182, %v2183
    %v2185 = vrot.slane %v2184, 1
    %v2186 = vadd.f32 %v2184, %v2185
    %v2187 = vsel %vm2088, %v1397, 0.0
    %v2188 = vrot.slane %v2187, 4
    %v2189 = vadd.f32 %v2187, %v2188
    %v2190 = vrot.slane %v2189, 2
    %v2191 = vadd.f32 %v2189, %v2190
    %v2192 = vrot.slane %v2191, 1
    %v2193 = vadd.f32 %v2191, %v2192
    %v2194 = vsel %vm2088, %v1398, 0.0
    %v2195 = vrot.slane %v2194, 4
    %v2196 = vadd.f32 %v2194, %v2195
    %v2197 = vrot.slane %v2196, 2
    %v2198 = vadd.f32 %v2196, %v2197
    %v2199 = vrot.slane %v2198, 1
    %v2200 = vadd.f32 %v2198, %v2199
    %v2201 = vstv %s48
    %v2202 = vadd.f32 %v2095, %v2201
    %v2203 = vadd.f32 %v2102, %v2201
    %v2204 = vadd.f32 %v2109, %v2201
    %v2205 = vadd.f32 %v2116, %v2201
    %v2206 = vadd.f32 %v2123, %v2201
    %v2207 = vadd.f32 %v2130, %v2201
    %v2208 = vadd.f32 %v2137, %v2201
    %v2209 = vadd.f32 %v2144, %v2201
    %v2210 = vadd.f32 %v2151, %v2201
    %v2211 = vadd.f32 %v2158, %v2201
    %v2212 = vadd.f32 %v2165, %v2201
    %v2213 = vadd.f32 %v2172, %v2201
    %v2214 = vadd.f32 %v2179, %v2201
    %v2215 = vadd.f32 %v2186, %v2201
    %v2216 = vadd.f32 %v2193, %v2201
    %v2217 = vadd.f32 %v2200, %v2201
    %v2218 = vstv %s49
    %v2219 = vmul.f32 %v2202, %v2218
    %v2220 = vmul.f32 %v2203, %v2218
    %v2221 = vmul.f32 %v2204, %v2218
    %v2222 = vmul.f32 %v2205, %v2218
    %v2223 = vmul.f32 %v2206, %v2218
    %v2224 = vmul.f32 %v2207, %v2218
    %v2225 = vmul.f32 %v2208, %v2218
    %v2226 = vmul.f32 %v2209, %v2218
    %v2227 = vmul.f32 %v2210, %v2218
    %v2228 = vmul.f32 %v2211, %v2218
    %v2229 = vmul.f32 %v2212, %v2218
    %v2230 = vmul.f32 %v2213, %v2218
    %v2231 = vmul.f32 %v2214, %v2218
    %v2232 = vmul.f32 %v2215, %v2218
    %v2233 = vmul.f32 %v2216, %v2218
    %v2234 = vmul.f32 %v2217, %v2218
    %v2235 = vstv %s50
    %v2236 = vadd.f32 %v2219, %v2235
    %v2237 = vadd.f32 %v2220, %v2235
    %v2238 = vadd.f32 %v2221, %v2235
    %v2239 = vadd.f32 %v2222, %v2235
    %v2240 = vadd.f32 %v2223, %v2235
    %v2241 = vadd.f32 %v2224, %v2235
    %v2242 = vadd.f32 %v2225, %v2235
    %v2243 = vadd.f32 %v2226, %v2235
    %v2244 = vadd.f32 %v2227, %v2235
    %v2245 = vadd.f32 %v2228, %v2235
    %v2246 = vadd.f32 %v2229, %v2235
    %v2247 = vadd.f32 %v2230, %v2235
    %v2248 = vadd.f32 %v2231, %v2235
    %v2249 = vadd.f32 %v2232, %v2235
    %v2250 = vadd.f32 %v2233, %v2235
    %v2251 = vadd.f32 %v2234, %v2235
    %v2252 = vxor.u32 %v2236, 2147483648
    %v2253 = vxor.u32 %v2237, 2147483648
    %v2254 = vxor.u32 %v2238, 2147483648
    %v2255 = vxor.u32 %v2239, 2147483648
    %v2256 = vxor.u32 %v2240, 2147483648
    %v2257 = vxor.u32 %v2241, 2147483648
    %v2258 = vxor.u32 %v2242, 2147483648
    %v2259 = vxor.u32 %v2243, 2147483648
    %v2260 = vxor.u32 %v2244, 2147483648
    %v2261 = vxor.u32 %v2245, 2147483648
    %v2262 = vxor.u32 %v2246, 2147483648
    %v2263 = vxor.u32 %v2247, 2147483648
    %v2264 = vxor.u32 %v2248, 2147483648
    %v2265 = vxor.u32 %v2249, 2147483648
    %v2266 = vxor.u32 %v2250, 2147483648
    %v2267 = vxor.u32 %v2251, 2147483648
    %v2268 = vmul.f32 %v2252, 1.442695
    %v2269 = vpow.pop %v2268
    %v2270 = vmul.f32 %v2253, 1.442695
    %v2271 = vpow.pop %v2270
    %v2272 = vmul.f32 %v2254, 1.442695
    %v2273 = vpow.pop %v2272
    %v2274 = vmul.f32 %v2255, 1.442695
    %v2275 = vpow.pop %v2274
    %v2276 = vmul.f32 %v2256, 1.442695
    %v2277 = vpow.pop %v2276
    %v2278 = vmul.f32 %v2257, 1.442695
    %v2279 = vpow.pop %v2278
    %v2280 = vmul.f32 %v2258, 1.442695
    %v2281 = vpow.pop %v2280
    %v2282 = vmul.f32 %v2259, 1.442695
    %v2283 = vpow.pop %v2282
    %v2284 = vmul.f32 %v2260, 1.442695
    %v2285 = vpow.pop %v2284
    %v2286 = vmul.f32 %v2261, 1.442695
    %v2287 = vpow.pop %v2286
    %v2288 = vmul.f32 %v2262, 1.442695
    %v2289 = vpow.pop %v2288
    %v2290 = vmul.f32 %v2263, 1.442695
    %v2291 = vpow.pop %v2290
    %v2292 = vmul.f32 %v2264, 1.442695
    %v2293 = vpow.pop %v2292
    %v2294 = vmul.f32 %v2265, 1.442695
    %v2295 = vpow.pop %v2294
    %v2296 = vmul.f32 %v2266, 1.442695
    %v2297 = vpow.pop %v2296
    %v2298 = vmul.f32 %v2267, 1.442695
    %v2299 = vpow.pop %v2298
    %v2300 = vadd.f32 %v2269, 1.0
    %v2301 = vadd.f32 %v2271, 1.0
    %v2302 = vadd.f32 %v2273, 1.0
    %v2303 = vadd.f32 %v2275, 1.0
    %v2304 = vadd.f32 %v2277, 1.0
    %v2305 = vadd.f32 %v2279, 1.0
    %v2306 = vadd.f32 %v2281, 1.0
    %v2307 = vadd.f32 %v2283, 1.0
    %v2308 = vadd.f32 %v2285, 1.0
    %v2309 = vadd.f32 %v2287, 1.0
    %v2310 = vadd.f32 %v2289, 1.0
    %v2311 = vadd.f32 %v2291, 1.0
    %v2312 = vadd.f32 %v2293, 1.0
    %v2313 = vadd.f32 %v2295, 1.0
    %v2314 = vadd.f32 %v2297, 1.0
    %v2315 = vadd.f32 %v2299, 1.0
    %v2316 = vrcp.pop %v2300
    %v2317 = vmul.f32 1.0, %v2316
    %v2318 = vrcp.pop %v2301
    %v2319 = vmul.f32 1.0, %v2318
    %v2320 = vrcp.pop %v2302
    %v2321 = vmul.f32 1.0, %v2320
    %v2322 = vrcp.pop %v2303
    %v2323 = vmul.f32 1.0, %v2322
    %v2324 = vrcp.pop %v2304
    %v2325 = vmul.f32 1.0, %v2324
    %v2326 = vrcp.pop %v2305
    %v2327 = vmul.f32 1.0, %v2326
    %v2328 = vrcp.pop %v2306
    %v2329 = vmul.f32 1.0, %v2328
    %v2330 = vrcp.pop %v2307
    %v2331 = vmul.f32 1.0, %v2330
    %v2332 = vrcp.pop %v2308
    %v2333 = vmul.f32 1.0, %v2332
    %v2334 = vrcp.pop %v2309
    %v2335 = vmul.f32 1.0, %v2334
    %v2336 = vrcp.pop %v2310
    %v2337 = vmul.f32 1.0, %v2336
    %v2338 = vrcp.pop %v2311
    %v2339 = vmul.f32 1.0, %v2338
    %v2340 = vrcp.pop %v2312
    %v2341 = vmul.f32 1.0, %v2340
    %v2342 = vrcp.pop %v2313
    %v2343 = vmul.f32 1.0, %v2342
    %v2344 = vrcp.pop %v2314
    %v2345 = vmul.f32 1.0, %v2344
    %v2346 = vrcp.pop %v2315
    %v2347 = vmul.f32 1.0, %v2346
    %v2348 = vld [vmem:[#allocation9] sm:$0xff]
    %v2349 = vld [vmem:[#allocation9 + $0x8] sm:$0xff]
    %v2350 = vld [vmem:[#allocation9 + $0x10] sm:$0xff]
    %v2351 = vld [vmem:[#allocation9 + $0x18] sm:$0xff]
    %v2352 = vld [vmem:[#allocation9 + $0x20] sm:$0xff]
    %v2353 = vld [vmem:[#allocation9 + $0x28] sm:$0xff]
    %v2354 = vld [vmem:[#allocation9 + $0x30] sm:$0xff]
    %v2355 = vld [vmem:[#allocation9 + $0x38] sm:$0xff]
    %v2356 = vld [vmem:[#allocation9 + $0x40] sm:$0xff]
    %v2357 = vld [vmem:[#allocation9 + $0x48] sm:$0xff]
    %v2358 = vld [vmem:[#allocation9 + $0x50] sm:$0xff]
    %v2359 = vld [vmem:[#allocation9 + $0x58] sm:$0xff]
    %v2360 = vld [vmem:[#allocation9 + $0x60] sm:$0xff]
    %v2361 = vld [vmem:[#allocation9 + $0x68] sm:$0xff]
    %v2362 = vld [vmem:[#allocation9 + $0x70] sm:$0xff]
    %v2363 = vld [vmem:[#allocation9 + $0x78] sm:$0xff]
    %s2364 = smul.f32 %s47, %s46
    %2366 = vrot.lane.b32.xlu0 %v1376, 6
    %v2367 = vpop.permute.xlu0 %2366
    %v2369 = vmul.f32 %v1239, %v2367
    %v2370 = vmul.f32 %v1240, %v2367
    %v2371 = vmul.f32 %v1241, %v2367
    %v2372 = vmul.f32 %v1242, %v2367
    %v2373 = vmul.f32 %v1243, %v2367
    %v2374 = vmul.f32 %v1244, %v2367
    %v2375 = vmul.f32 %v1245, %v2367
    %v2376 = vmul.f32 %v1246, %v2367
    %v2377 = vmul.f32 %v1247, %v2367
    %v2378 = vmul.f32 %v1248, %v2367
    %v2379 = vmul.f32 %v1249, %v2367
    %v2380 = vmul.f32 %v1250, %v2367
    %v2381 = vmul.f32 %v1251, %v2367
    %v2382 = vmul.f32 %v1252, %v2367
    %v2383 = vmul.f32 %v1253, %v2367
    %v2384 = vmul.f32 %v1254, %v2367
    %v2385 = vstv %s2364
    %v2386 = vmul.f32 %v2385, %v2369
    %v2387 = vmul.f32 %v2385, %v2370
    %v2388 = vmul.f32 %v2385, %v2371
    %v2389 = vmul.f32 %v2385, %v2372
    %v2390 = vmul.f32 %v2385, %v2373
    %v2391 = vmul.f32 %v2385, %v2374
    %v2392 = vmul.f32 %v2385, %v2375
    %v2393 = vmul.f32 %v2385, %v2376
    %v2394 = vmul.f32 %v2385, %v2377
    %v2395 = vmul.f32 %v2385, %v2378
    %v2396 = vmul.f32 %v2385, %v2379
    %v2397 = vmul.f32 %v2385, %v2380
    %v2398 = vmul.f32 %v2385, %v2381
    %v2399 = vmul.f32 %v2385, %v2382
    %v2400 = vmul.f32 %v2385, %v2383
    %v2401 = vmul.f32 %v2385, %v2384
    %2418 = vrot.lane.b32.xlu0 %v2317, 6
    %v2419 = vpop.permute.xlu0 %2418
    %2420 = vrot.lane.b32.xlu0 %v2319, 6
    %v2421 = vpop.permute.xlu0 %2420
    %2422 = vrot.lane.b32.xlu0 %v2321, 6
    %v2423 = vpop.permute.xlu0 %2422
    %2424 = vrot.lane.b32.xlu0 %v2323, 6
    %v2425 = vpop.permute.xlu0 %2424
    %2426 = vrot.lane.b32.xlu0 %v2325, 6
    %v2427 = vpop.permute.xlu0 %2426
    %2428 = vrot.lane.b32.xlu0 %v2327, 6
    %v2429 = vpop.permute.xlu0 %2428
    %2430 = vrot.lane.b32.xlu0 %v2329, 6
    %v2431 = vpop.permute.xlu0 %2430
    %2432 = vrot.lane.b32.xlu0 %v2331, 6
    %v2433 = vpop.permute.xlu0 %2432
    %2434 = vrot.lane.b32.xlu0 %v2333, 6
    %v2435 = vpop.permute.xlu0 %2434
    %2436 = vrot.lane.b32.xlu0 %v2335, 6
    %v2437 = vpop.permute.xlu0 %2436
    %2438 = vrot.lane.b32.xlu0 %v2337, 6
    %v2439 = vpop.permute.xlu0 %2438
    %2440 = vrot.lane.b32.xlu0 %v2339, 6
    %v2441 = vpop.permute.xlu0 %2440
    %2442 = vrot.lane.b32.xlu0 %v2341, 6
    %v2443 = vpop.permute.xlu0 %2442
    %2444 = vrot.lane.b32.xlu0 %v2343, 6
    %v2445 = vpop.permute.xlu0 %2444
    %2446 = vrot.lane.b32.xlu0 %v2345, 6
    %v2447 = vpop.permute.xlu0 %2446
    %2448 = vrot.lane.b32.xlu0 %v2347, 6
    %v2449 = vpop.permute.xlu0 %2448
    %v2466 = vmul.f32 %v2386, %v2419
    %v2467 = vmul.f32 %v2387, %v2421
    %v2468 = vmul.f32 %v2388, %v2423
    %v2469 = vmul.f32 %v2389, %v2425
    %v2470 = vmul.f32 %v2390, %v2427
    %v2471 = vmul.f32 %v2391, %v2429
    %v2472 = vmul.f32 %v2392, %v2431
    %v2473 = vmul.f32 %v2393, %v2433
    %v2474 = vmul.f32 %v2394, %v2435
    %v2475 = vmul.f32 %v2395, %v2437
    %v2476 = vmul.f32 %v2396, %v2439
    %v2477 = vmul.f32 %v2397, %v2441
    %v2478 = vmul.f32 %v2398, %v2443
    %v2479 = vmul.f32 %v2399, %v2445
    %v2480 = vmul.f32 %v2400, %v2447
    %v2481 = vmul.f32 %v2401, %v2449
    %2498 = vrot.lane.b32.xlu0 %v2466, 122
    %v2499 = vpop.permute.xlu0 %2498
    %2500 = vrot.lane.b32.xlu0 %v2467, 122
    %v2501 = vpop.permute.xlu0 %2500
    %2502 = vrot.lane.b32.xlu0 %v2468, 122
    %v2503 = vpop.permute.xlu0 %2502
    %2504 = vrot.lane.b32.xlu0 %v2469, 122
    %v2505 = vpop.permute.xlu0 %2504
    %2506 = vrot.lane.b32.xlu0 %v2470, 122
    %v2507 = vpop.permute.xlu0 %2506
    %2508 = vrot.lane.b32.xlu0 %v2471, 122
    %v2509 = vpop.permute.xlu0 %2508
    %2510 = vrot.lane.b32.xlu0 %v2472, 122
    %v2511 = vpop.permute.xlu0 %2510
    %2512 = vrot.lane.b32.xlu0 %v2473, 122
    %v2513 = vpop.permute.xlu0 %2512
    %2514 = vrot.lane.b32.xlu0 %v2474, 122
    %v2515 = vpop.permute.xlu0 %2514
    %2516 = vrot.lane.b32.xlu0 %v2475, 122
    %v2517 = vpop.permute.xlu0 %2516
    %2518 = vrot.lane.b32.xlu0 %v2476, 122
    %v2519 = vpop.permute.xlu0 %2518
    %2520 = vrot.lane.b32.xlu0 %v2477, 122
    %v2521 = vpop.permute.xlu0 %2520
    %2522 = vrot.lane.b32.xlu0 %v2478, 122
    %v2523 = vpop.permute.xlu0 %2522
    %2524 = vrot.lane.b32.xlu0 %v2479, 122
    %v2525 = vpop.permute.xlu0 %2524
    %2526 = vrot.lane.b32.xlu0 %v2480, 122
    %v2527 = vpop.permute.xlu0 %2526
    %2528 = vrot.lane.b32.xlu0 %v2481, 122
    %v2529 = vpop.permute.xlu0 %2528
    %v2546 = vadd.f32 %v2348, %v2499
    %v2547 = vadd.f32 %v2349, %v2501
    %v2548 = vadd.f32 %v2350, %v2503
    %v2549 = vadd.f32 %v2351, %v2505
    %v2550 = vadd.f32 %v2352, %v2507
    %v2551 = vadd.f32 %v2353, %v2509
    %v2552 = vadd.f32 %v2354, %v2511
    %v2553 = vadd.f32 %v2355, %v2513
    %v2554 = vadd.f32 %v2356, %v2515
    %v2555 = vadd.f32 %v2357, %v2517
    %v2556 = vadd.f32 %v2358, %v2519
    %v2557 = vadd.f32 %v2359, %v2521
    %v2558 = vadd.f32 %v2360, %v2523
    %v2559 = vadd.f32 %v2361, %v2525
    %v2560 = vadd.f32 %v2362, %v2527
    %v2561 = vadd.f32 %v2363, %v2529
    %2562 = vst.msk [vmem:[#allocation9] sm:$0xff] %vm823, %v2546
    %2563 = vst.msk [vmem:[#allocation9 + $0x8] sm:$0xff] %vm823, %v2547
    %2564 = vst.msk [vmem:[#allocation9 + $0x10] sm:$0xff] %vm823, %v2548
    %2565 = vst.msk [vmem:[#allocation9 + $0x18] sm:$0xff] %vm823, %v2549
    %2566 = vst.msk [vmem:[#allocation9 + $0x20] sm:$0xff] %vm823, %v2550
    %2567 = vst.msk [vmem:[#allocation9 + $0x28] sm:$0xff] %vm823, %v2551
    %2568 = vst.msk [vmem:[#allocation9 + $0x30] sm:$0xff] %vm823, %v2552
    %2569 = vst.msk [vmem:[#allocation9 + $0x38] sm:$0xff] %vm823, %v2553
    %2570 = vst.msk [vmem:[#allocation9 + $0x40] sm:$0xff] %vm823, %v2554
    %2571 = vst.msk [vmem:[#allocation9 + $0x48] sm:$0xff] %vm823, %v2555
    %2572 = vst.msk [vmem:[#allocation9 + $0x50] sm:$0xff] %vm823, %v2556
    %2573 = vst.msk [vmem:[#allocation9 + $0x58] sm:$0xff] %vm823, %v2557
    %2574 = vst.msk [vmem:[#allocation9 + $0x60] sm:$0xff] %vm823, %v2558
    %2575 = vst.msk [vmem:[#allocation9 + $0x68] sm:$0xff] %vm823, %v2559
    %2576 = vst.msk [vmem:[#allocation9 + $0x70] sm:$0xff] %vm823, %v2560
    %2577 = vst.msk [vmem:[#allocation9 + $0x78] sm:$0xff] %vm823, %v2561
    // Predicated region
    $region40: #{tpu_custom_call.1} parent=1 // pred_check
      _
    $region41: #{tpu_custom_call.1} parent=1 // pred_check_branch
      %2579 = sbr.rel (0) target = $region43
    $region42: #{tpu_custom_call.1} parent=1 // pred_region
      %s2581 = ssub.s32 2048, 2048
      %2582 = vsyncadd [#allocation6], %s2581
      %s2583 = sshll.u32 [#allocation9], 4
      %s2584 = int_to_ptr.vmem [resolvable:$true] %s2583
      %2589 = dma.vmem_to_hbm [thread:$0]  %s2584, 2048, %s4, [#allocation6], 128, 128, 8
    $region43: #{tpu_custom_call.1} parent=1 // pred_fallthru
      _
    // Predicated region
    $region44: #{tpu_custom_call.1} parent=1 // pred_check
      _
    $region45: #{tpu_custom_call.1} parent=1 // pred_check_branch
      %2591 = sbr.rel (0) target = $region47
    $region46: #{tpu_custom_call.1} parent=1 // pred_region
      %2592 = dma.done [#allocation6], 2048
    $region47: #{tpu_custom_call.1} parent=1 // pred_fallthru
      _
    %2593 = vsyncpa [#allocation5], 1
    %2594 = vsyncpa [#allocation6], 1
    %2595 = vsyncpa [#allocation7], 1

</llo_original>
